<compile_context>
chip_gen: v5e
topology: v5e:2x2
jax: 0.10.0
libtpu: 0.0.40
codegen_flags: <defaults>
</compile_context>

<pallas_src>
import functools

import jax
import jax.numpy as jnp
from jax import lax
from jax.experimental import pallas as pl
from jax.experimental.pallas import tpu as pltpu


_NEG_BIG = -1e30   # bias of padded class columns -> exp() == 0 in log_softmax
_ALIGN = 16        # slab section row alignment: multiple of both the f32 (8,128)
                   # and bf16 (16,128) native sublane tilings


def _ru(n: int) -> int:
    return ((n + _ALIGN - 1) // _ALIGN) * _ALIGN


def _slab_offsets(d: int, h: int):
    """Row offsets of each parameter section inside the merged 128-lane slab."""
    o = {}
    o["xg"] = 0                          # (d, 4h)   wx   @ Wg  (input proj, gate-fused)
    o["rec"] = _ru(d)                    # (h, 4h)   wph  @ Wg  (recurrent)
    o["root"] = o["rec"] + _ru(h)        # (h, 4h)   root @ Wg  (wih or wx path)
    o["bl"] = o["root"] + _ru(h)         # (1, 4h)   leaf bias
    o["br"] = o["bl"] + _ALIGN           # (1, 4h)   root bias
    o["wh"] = o["br"] + _ALIGN           # (2h, 128) pair-head [mult|absd] weight
    o["bwh"] = o["wh"] + _ru(2 * h)      # (1, 128)  pair-head bias
    o["wp"] = o["bwh"] + _ALIGN          # (128,128) classifier weight (zero-padded)
    o["bwp"] = o["wp"] + 128             # (1, 128)  classifier bias (-1e30 padding)
    o["rows"] = o["bwp"] + _ALIGN
    return o


# -----------------------------------------------------------------------------
# Pallas kernel: one grid step = TB sentence pairs (rows [0:TB]=A, [TB:2TB]=B)
# -----------------------------------------------------------------------------
def pair_cross_lstm_kernel(x_ref, len_ref, w_ref, out_ref, *, tb, lmax, d, h):
    f32 = jnp.float32
    D, H, TB = d, h, tb
    M = 2 * TB
    o = _slab_offsets(D, H)
    wdt = w_ref.dtype                      # matmul-operand dtype contract (f32/bf16)

    # ---- hoisted parameter loads (resident across the unrolled recurrence) ----
    w_xg = w_ref[o["xg"]:o["xg"] + D, :]
    w_rec = w_ref[o["rec"]:o["rec"] + H, :]
    w_root = w_ref[o["root"]:o["root"] + H, :]
    b_leaf = w_ref[o["bl"]:o["bl"] + 1, :].astype(f32)
    b_root = w_ref[o["br"]:o["br"] + 1, :].astype(f32)
    w_h = w_ref[o["wh"]:o["wh"] + 2 * H, :]
    b_wh = w_ref[o["bwh"]:o["bwh"] + 1, :].astype(f32)
    w_p = w_ref[o["wp"]:o["wp"] + 128, :]
    b_wp = w_ref[o["bwp"]:o["bwp"] + 1, :].astype(f32)

    def mm(a, b):
        # Only the MXU operands follow the slab dtype; accumulation/elementwise
        # math stays f32 (important on v5e which has no bf16 VPU/EUP path).
        return jnp.dot(a.astype(wdt), b, preferred_element_type=f32)

    lens = len_ref[...]                    # (M, 1) int32 per-row sentence length

    # Input projection + leaf bias for every (timestep, row): ONE matmul, hoisted
    # out of the serial recurrence.
    x_gates = mm(x_ref[...], w_xg) + b_leaf             # (lmax*M, 4H)

    def cell(pre, prev_c):
        # i/o/f columns of `pre` were pre-scaled by 0.5 at pack time, so a single
        # full-vreg tanh + one full-vreg affine recovers sigmoid(i,o,f) and
        # tanh(u); the per-gate lane slices below lower to XLU lane shifts.
        g = jnp.tanh(pre)                                # (M, 4H): one EUP op
        sg = 0.5 * g + 0.5
        i = sg[:, 0:H]
        og = sg[:, H:2 * H]
        f = sg[:, 2 * H:3 * H]
        u = g[:, 3 * H:4 * H]
        c_new = i * u + f * prev_c
        h_new = og * jnp.tanh(c_new)
        return h_new, c_new

    hh = jnp.zeros((M, H), f32)
    cc = jnp.zeros((M, H), f32)
    # Statically unrolled: lmax is a small compile-time constant, letting the
    # scheduler overlap step t's EUP/VPU tail with step t+1's recurrent matmul.
    for t in range(lmax):
        pre = x_gates[t * M:(t + 1) * M, :] + mm(hh, w_rec)
        h_new, c_new = cell(pre, cc)
        live = lens > t                                  # (M, 1) row validity
        hh = jnp.where(live, h_new, hh)                  # freeze finished rows
        cc = jnp.where(live, c_new, cc)

    # Root cell (prev_h = prev_c = 0). w_root already encodes the module's
    # encode_inputx (hidden_dim == input_dim) vs encode_inputh path (pack time).
    h_root, _ = cell(mm(hh, w_root) + b_root, jnp.zeros((M, H), f32))

    # ---- pair head: one fused (TB, 2H) @ (2H, 128) matmul ----
    ha = h_root[0:TB, :]
    hb = h_root[TB:2 * TB, :]
    feat = jnp.concatenate([ha * hb, jnp.abs(ha - hb)], axis=1)      # (TB, 2H)
    hidden = 0.5 * jnp.tanh(mm(feat, w_h) + b_wh) + 0.5              # sigmoid via tanh
    logits = mm(hidden, w_p) + b_wp          # (TB, 128); padded classes at -1e30

    # log_softmax over the full 128 lanes (padded columns vanish: exp(-1e30)=0);
    # lane-dense unmasked (TB, 128) store; the wrapper slices [:, :num_classes].
    m = jnp.max(logits, axis=-1, keepdims=True)
    s = logits - m
    out_ref[...] = s - jnp.log(jnp.sum(jnp.exp(s), axis=-1, keepdims=True))


# -----------------------------------------------------------------------------
# Parameter packing (done once, outside the jitted forward)
# -----------------------------------------------------------------------------
def pack_params(params, input_dim, hidden_dim, pair_dim, num_classes,
                dtype=jnp.float32):
    """Fold/fuse all module parameters into one 128-lane-wide slab.

    dtype=float32 keeps the ~1e-5 match with the f32 reference; bfloat16 gives
    the single-pass MXU path on v6e/v7x at relaxed (~1e-2) tolerance.
    """
    D, H, P, C = input_dim, hidden_dim, pair_dim, num_classes
    assert 4 * H == 128, "packing assumes hidden_dim == 32 (4H == 128 lanes)"
    assert P <= 128 and C <= 128
    dot = functools.partial(jnp.dot, precision=lax.Precision.HIGHEST)

    # Fused gate weight/bias: columns [0:H]=i, [H:2H]=o, [2H:3H]=f, [3H:4H]=u.
    wg = jnp.concatenate([params["wi"], params["wo"], params["wf"], params["wu"]], axis=1)
    bg = jnp.concatenate([params["bi"], params["bo"], params["bf"], params["bu"]], axis=1)

    # tanh trick: sigmoid(z) = 0.5*tanh(z/2)+0.5 -> pre-scale i/o/f columns by 0.5
    # so the kernel needs only one full-vreg tanh per step.
    col_scale = jnp.concatenate(
        [jnp.full((3 * H,), 0.5, jnp.float32), jnp.ones((H,), jnp.float32)])[None, :]

    # Root step follows the module: encode_inputx when H == D, else encode_inputh.
    root_w, root_b = ((params["wx"], params["bx"]) if H == D
                      else (params["wih"], params["bih"]))

    w_xg = dot(params["wx"], wg) * col_scale                       # (D, 4H)
    w_rec = dot(params["wph"], wg) * col_scale                     # (H, 4H)
    w_root = dot(root_w, wg) * col_scale                           # (H, 4H)
    b_leaf = (dot(params["bx"] + params["bph"], wg) + bg) * col_scale
    b_root = (dot(root_b + params["bph"], wg) + bg) * col_scale

    # Pair head, padded to 128 lanes; 0.5-scaled for the same tanh trick.
    w_h = jnp.zeros((2 * H, 128), jnp.float32)
    w_h = w_h.at[0:H, 0:P].set(params["wwh_m"])
    w_h = w_h.at[H:2 * H, 0:P].set(params["wwh_a"])
    w_h = 0.5 * w_h
    b_wh = jnp.zeros((1, 128), jnp.float32).at[0, 0:P].set(0.5 * params["bwh"][0])
    w_p = jnp.zeros((128, 128), jnp.float32).at[0:P, 0:C].set(params["wwp"])
    b_wp = jnp.full((1, 128), _NEG_BIG, jnp.float32).at[0, 0:C].set(params["bwp"][0])

    o = _slab_offsets(D, H)
    slab = jnp.zeros((o["rows"], 128), jnp.float32)
    slab = slab.at[o["xg"]:o["xg"] + D, :].set(w_xg)
    slab = slab.at[o["rec"]:o["rec"] + H, :].set(w_rec)
    slab = slab.at[o["root"]:o["root"] + H, :].set(w_root)
    slab = slab.at[o["bl"], :].set(b_leaf[0])
    slab = slab.at[o["br"], :].set(b_root[0])
    slab = slab.at[o["wh"]:o["wh"] + 2 * H, :].set(w_h)
    slab = slab.at[o["bwh"], :].set(b_wh[0])
    slab = slab.at[o["wp"]:o["wp"] + 128, :].set(w_p)
    slab = slab.at[o["bwp"], :].set(b_wp[0])
    return slab.astype(dtype)


# -----------------------------------------------------------------------------
# Input packing: variable-length embedded sentence pairs -> kernel layout
# -----------------------------------------------------------------------------
def build_inputs(xa_list, xb_list, tb):
    """Per grid tile of `tb` pairs the row layout is [A sentences | B sentences];
    timesteps are zero-padded to lmax and masked in-kernel via `lens`."""
    B = len(xa_list)
    assert B == len(xb_list) and B % tb == 0 and (2 * tb) % 8 == 0
    n_tiles = B // tb
    D = xa_list[0].shape[1]
    lmax = max(max(x.shape[0] for x in xa_list), max(x.shape[0] for x in xb_list))

    def pad(x):
        return jnp.zeros((lmax, D), jnp.float32).at[:x.shape[0]].set(x)

    xa_pad = jnp.stack([pad(x) for x in xa_list])          # (B, lmax, D)
    xb_pad = jnp.stack([pad(x) for x in xb_list])          # (B, lmax, D)
    xt = jnp.concatenate([xa_pad.reshape(n_tiles, tb, lmax, D),
                          xb_pad.reshape(n_tiles, tb, lmax, D)], axis=1)
    x_stack = xt.transpose(0, 2, 1, 3).reshape(n_tiles * lmax * 2 * tb, D)

    la = jnp.array([x.shape[0] for x in xa_list], jnp.int32).reshape(n_tiles, tb)
    lb = jnp.array([x.shape[0] for x in xb_list], jnp.int32).reshape(n_tiles, tb)
    lens = jnp.concatenate([la, lb], axis=1).reshape(2 * B, 1)
    return x_stack, lens, lmax


# -----------------------------------------------------------------------------
# Wrapper
# -----------------------------------------------------------------------------
@functools.partial(jax.jit, static_argnames=("tb", "lmax", "input_dim",
                                              "hidden_dim", "num_classes"))
def pair_cross_lstm_forward(x_stack, lens, slab, *, tb, lmax, input_dim,
                            hidden_dim, num_classes):
    n_tiles = x_stack.shape[0] // (lmax * 2 * tb)
    B = n_tiles * tb
    R = slab.shape[0]
    kernel = functools.partial(pair_cross_lstm_kernel,
                               tb=tb, lmax=lmax, d=input_dim, h=hidden_dim)
    out = pl.pallas_call(
        kernel,
        out_shape=jax.ShapeDtypeStruct((B, 128), jnp.float32),
        grid=(n_tiles,),
        in_specs=[
            pl.BlockSpec((lmax * 2 * tb, input_dim), lambda i: (i, 0)),
            pl.BlockSpec((2 * tb, 1), lambda i: (i, 0)),
            pl.BlockSpec((R, 128), lambda i: (0, 0)),     # resident parameter slab
        ],
        out_specs=pl.BlockSpec((tb, 128), lambda i: (i, 0)),
        compiler_params=pltpu.CompilerParams(
            dimension_semantics=("parallel",)),           # megacore sharding (v7x)
    )(x_stack, lens, slab)
    return out[:, :num_classes]       # lane-padded store sliced back to C classes


# -----------------------------------------------------------------------------
# Pure-JAX reference (original, unfused math) for a sanity check
# -----------------------------------------------------------------------------
def reference_forward(xa, xb, p):
    dot = functools.partial(jnp.dot, precision=lax.Precision.HIGHEST)
    H = p["wph"].shape[0]
    D = p["wx"].shape[0]

    def cell(hx, prev_c):
        i = jax.nn.sigmoid(dot(hx, p["wi"]) + p["bi"])
        o = jax.nn.sigmoid(dot(hx, p["wo"]) + p["bo"])
        f = jax.nn.sigmoid(dot(hx, p["wf"]) + p["bf"])
        u = jnp.tanh(dot(hx, p["wu"]) + p["bu"])
        c = i * u + f * prev_c
        return o * jnp.tanh(c), c

    def encode(x):
        h = jnp.zeros((1, H), jnp.float32)
        c = jnp.zeros((1, H), jnp.float32)
        for t in range(x.shape[0]):
            hx = dot(x[t:t + 1], p["wx"]) + p["bx"] + dot(h, p["wph"]) + p["bph"]
            h, c = cell(hx, c)
        if H == D:
            hx_root = dot(h, p["wx"]) + p["bx"] + p["bph"]
        else:
            hx_root = dot(h, p["wih"]) + p["bih"] + p["bph"]
        h_root, _ = cell(hx_root, jnp.zeros_like(c))
        return h_root

    ha, hb = encode(xa), encode(xb)
    mult, absd = ha * hb, jnp.abs(ha - hb)
    hid = jax.nn.sigmoid(dot(mult, p["wwh_m"]) + dot(absd, p["wwh_a"]) + p["bwh"])
    logits = dot(hid, p["wwp"]) + p["bwp"]
    return jax.nn.log_softmax(logits, axis=-1)


# -----------------------------------------------------------------------------
# Deterministic parameter construction
# -----------------------------------------------------------------------------
def make_params(key, input_dim, hidden_dim, pair_dim, num_classes, vocab_size,
                word_scale=0.05):
    keys = jax.random.split(key, 20)
    u = lambda k, shape, s: jax.random.uniform(k, shape, jnp.float32, -s, s)
    D, H, P, C = input_dim, hidden_dim, pair_dim, num_classes
    return {
        "embed": u(keys[0], (vocab_size, D), word_scale),
        "wx":  u(keys[1], (D, H), 0.1), "bx":  u(keys[2], (1, H), 0.1),
        "wih": u(keys[3], (H, H), 0.1), "bih": u(keys[4], (1, H), 0.1),
        "wph": u(keys[5], (H, H), 0.1), "bph": u(keys[6], (1, H), 0.1),
        "wi":  u(keys[7], (H, H), 0.1), "bi":  u(keys[8], (1, H), 0.1),
        "wo":  u(keys[9], (H, H), 0.1), "bo":  u(keys[10], (1, H), 0.1),
        "wf":  u(keys[11], (H, H), 0.1), "bf": u(keys[12], (1, H), 0.1),
        "wu":  u(keys[13], (H, H), 0.1), "bu": u(keys[14], (1, H), 0.1),
        "wwh_m": u(keys[15], (H, P), 0.1),
        "wwh_a": u(keys[16], (H, P), 0.1),
        "bwh":   u(keys[17], (1, P), 0.1),
        "wwp":   u(keys[18], (P, C), 0.1),
        "bwp":   u(keys[19], (1, C), 0.1),
    }


if __name__ == "__main__":
    # Small shapes consistent with the module (hidden_dim != input_dim path).
    input_dim, hidden_dim, pair_dim, num_classes = 16, 32, 24, 3
    vocab_size = 50
    TB = 8                      # pairs per grid tile -> (2*TB, H) recurrent carry
    N_TILES = 2                 # grid size; tiles shard across TensorCores on v7x
    B = TB * N_TILES

    key = jax.random.PRNGKey(0)
    kp, ks = jax.random.split(key)
    params = make_params(kp, input_dim, hidden_dim, pair_dim, num_classes, vocab_size)

    # Variable-length sentence pairs (leaves of flat trees).  The embedding
    # lookup (gather) is plain-JAX glue outside the kernel.
    lengths_a = [8, 6, 5, 7, 3, 8, 4, 6, 7, 5, 8, 2, 6, 4, 7, 8]
    lengths_b = [6, 8, 7, 4, 8, 5, 6, 3, 5, 8, 4, 7, 8, 6, 2, 5]
    wkeys = jax.random.split(ks, 2 * B)
    xa_list = [jnp.take(params["embed"],
                        jax.random.randint(wkeys[2 * i], (lengths_a[i],), 0, vocab_size),
                        axis=0) for i in range(B)]
    xb_list = [jnp.take(params["embed"],
                        jax.random.randint(wkeys[2 * i + 1], (lengths_b[i],), 0, vocab_size),
                        axis=0) for i in range(B)]

    x_stack, lens, lmax = build_inputs(xa_list, xb_list, TB)

    # f32 slab: accurate path (matches the f32 reference).
    slab_f32 = pack_params(params, input_dim, hidden_dim, pair_dim, num_classes,
                           dtype=jnp.float32)
    out = pair_cross_lstm_forward(x_stack, lens, slab_f32, tb=TB, lmax=lmax,
                                  input_dim=input_dim, hidden_dim=hidden_dim,
                                  num_classes=num_classes)
    out = jax.block_until_ready(out)

    ref = jnp.concatenate(
        [reference_forward(xa_list[i], xb_list[i], params) for i in range(B)], axis=0)
    assert out.shape == (B, num_classes)
    assert jnp.allclose(out, ref, atol=2e-5, rtol=2e-5), \
        float(jnp.max(jnp.abs(out - ref)))

    # bf16-operand slab: fast MXU path (v6e/v7x), relaxed tolerance.
    slab_bf16 = pack_params(params, input_dim, hidden_dim, pair_dim, num_classes,
                            dtype=jnp.bfloat16)
    out_bf16 = jax.block_until_ready(
        pair_cross_lstm_forward(x_stack, lens, slab_bf16, tb=TB, lmax=lmax,
                                input_dim=input_dim, hidden_dim=hidden_dim,
                                num_classes=num_classes))
    assert jnp.allclose(out_bf16, ref, atol=2e-2, rtol=2e-2), \
        float(jnp.max(jnp.abs(out_bf16 - ref)))

    print("KERNEL_OK")
</pallas_src>

<mosaic_0001>
module attributes {stable_mosaic.version = 11 : i64} {
  func.func @pair_cross_lstm_kernel(%arg0: i32, %arg1: memref<128x16xf32, #tpu.memory_space<vmem>>, %arg2: memref<16x1xi32, #tpu.memory_space<vmem>>, %arg3: memref<336x128xf32, #tpu.memory_space<vmem>>, %arg4: memref<8x128xf32, #tpu.memory_space<vmem>>) attributes {dimension_semantics = [#tpu.dimension_semantics<parallel>], iteration_bounds = array<i64: 2>, scalar_prefetch = 0 : i64, scratch_operands = 0 : i64, tpu.core_type = #tpu.core_type<tc>, window_params = [{transform_indices = @transform_0, window_bounds = array<i64: 128, 16>}, {transform_indices = @transform_1, window_bounds = array<i64: 16, 1>}, {pipeline_mode = #tpu.pipeline_mode<synchronous>, transform_indices = @transform_2, window_bounds = array<i64: 336, 128>}, {transform_indices = @transform_3, window_bounds = array<i64: 8, 128>}]} {
    %c0 = arith.constant 0 : index
    %c0_0 = arith.constant 0 : index
    %0 = vector.load %arg3[%c0, %c0_0] : memref<336x128xf32, #tpu.memory_space<vmem>>, vector<16x128xf32>
    %c16 = arith.constant 16 : index
    %c0_1 = arith.constant 0 : index
    %1 = vector.load %arg3[%c16, %c0_1] : memref<336x128xf32, #tpu.memory_space<vmem>>, vector<32x128xf32>
    %c48 = arith.constant 48 : index
    %c0_2 = arith.constant 0 : index
    %2 = vector.load %arg3[%c48, %c0_2] : memref<336x128xf32, #tpu.memory_space<vmem>>, vector<32x128xf32>
    %c80 = arith.constant 80 : index
    %c0_3 = arith.constant 0 : index
    %3 = vector.load %arg3[%c80, %c0_3] : memref<336x128xf32, #tpu.memory_space<vmem>>, vector<1x128xf32>
    %c96 = arith.constant 96 : index
    %c0_4 = arith.constant 0 : index
    %4 = vector.load %arg3[%c96, %c0_4] : memref<336x128xf32, #tpu.memory_space<vmem>>, vector<1x128xf32>
    %c112 = arith.constant 112 : index
    %c0_5 = arith.constant 0 : index
    %5 = vector.load %arg3[%c112, %c0_5] : memref<336x128xf32, #tpu.memory_space<vmem>>, vector<64x128xf32>
    %c176 = arith.constant 176 : index
    %c0_6 = arith.constant 0 : index
    %6 = vector.load %arg3[%c176, %c0_6] : memref<336x128xf32, #tpu.memory_space<vmem>>, vector<1x128xf32>
    %c192 = arith.constant 192 : index
    %c0_7 = arith.constant 0 : index
    %7 = vector.load %arg3[%c192, %c0_7] : memref<336x128xf32, #tpu.memory_space<vmem>>, vector<128x128xf32>
    %c320 = arith.constant 320 : index
    %c0_8 = arith.constant 0 : index
    %8 = vector.load %arg3[%c320, %c0_8] : memref<336x128xf32, #tpu.memory_space<vmem>>, vector<1x128xf32>
    %c0_9 = arith.constant 0 : index
    %c0_10 = arith.constant 0 : index
    %9 = vector.load %arg2[%c0_9, %c0_10] : memref<16x1xi32, #tpu.memory_space<vmem>>, vector<16x1xi32>
    %c0_11 = arith.constant 0 : index
    %c0_12 = arith.constant 0 : index
    %10 = vector.load %arg1[%c0_11, %c0_12] : memref<128x16xf32, #tpu.memory_space<vmem>>, vector<128x16xf32>
    %cst = arith.constant dense<0.000000e+00> : vector<128x128xf32>
    %11 = tpu.matmul %10, %0, %cst {dimension_numbers = #tpu.dot_dimension_numbers<[1], [0], [0], [1], [0, 0, 1, 1], [], []>} : vector<128x16xf32>, vector<16x128xf32>, vector<128x128xf32> -> vector<128x128xf32>
    %12 = vector.broadcast %3 : vector<1x128xf32> to vector<128x128xf32>
    %13 = arith.addf %11, %12 : vector<128x128xf32>
    %cst_13 = arith.constant 0.000000e+00 : f32
    %14 = vector.broadcast %cst_13 : f32 to vector<16x32xf32>
    %cst_14 = arith.constant 0.000000e+00 : f32
    %15 = vector.broadcast %cst_14 : f32 to vector<16x32xf32>
    %16 = vector.extract_strided_slice %13 {offsets = [0, 0], sizes = [16, 128], strides = [1, 1]} : vector<128x128xf32> to vector<16x128xf32>
    %cst_15 = arith.constant dense<0.000000e+00> : vector<16x128xf32>
    %17 = tpu.matmul %14, %1, %cst_15 {dimension_numbers = #tpu.dot_dimension_numbers<[1], [0], [0], [1], [0, 0, 1, 1], [], []>} : vector<16x32xf32>, vector<32x128xf32>, vector<16x128xf32> -> vector<16x128xf32>
    %18 = arith.addf %16, %17 : vector<16x128xf32>
    %19 = math.tanh %18 : vector<16x128xf32>
    %cst_16 = arith.constant 5.000000e-01 : f32
    %20 = vector.broadcast %cst_16 : f32 to vector<16x128xf32>
    %21 = arith.mulf %20, %19 : vector<16x128xf32>
    %cst_17 = arith.constant 5.000000e-01 : f32
    %22 = vector.broadcast %cst_17 : f32 to vector<16x128xf32>
    %23 = arith.addf %21, %22 : vector<16x128xf32>
    %24 = vector.extract_strided_slice %23 {offsets = [0, 0], sizes = [16, 32], strides = [1, 1]} : vector<16x128xf32> to vector<16x32xf32>
    %25 = vector.extract_strided_slice %23 {offsets = [0, 32], sizes = [16, 32], strides = [1, 1]} : vector<16x128xf32> to vector<16x32xf32>
    %26 = vector.extract_strided_slice %23 {offsets = [0, 64], sizes = [16, 32], strides = [1, 1]} : vector<16x128xf32> to vector<16x32xf32>
    %27 = vector.extract_strided_slice %19 {offsets = [0, 96], sizes = [16, 32], strides = [1, 1]} : vector<16x128xf32> to vector<16x32xf32>
    %28 = arith.mulf %24, %27 : vector<16x32xf32>
    %29 = arith.mulf %26, %15 : vector<16x32xf32>
    %30 = arith.addf %28, %29 : vector<16x32xf32>
    %31 = math.tanh %30 : vector<16x32xf32>
    %32 = arith.mulf %25, %31 : vector<16x32xf32>
    %c0_i32 = arith.constant 0 : i32
    %33 = vector.broadcast %c0_i32 : i32 to vector<16x1xi32>
    %34 = arith.cmpi sgt, %9, %33 : vector<16x1xi32>
    %35 = vector.shape_cast %34 : vector<16x1xi1> to vector<16x1xi1>
    %36 = vector.broadcast %35 : vector<16x1xi1> to vector<16x32xi1>
    %37 = arith.select %36, %32, %14 : vector<16x32xi1>, vector<16x32xf32>
    %38 = vector.shape_cast %34 : vector<16x1xi1> to vector<16x1xi1>
    %39 = vector.broadcast %38 : vector<16x1xi1> to vector<16x32xi1>
    %40 = arith.select %39, %30, %15 : vector<16x32xi1>, vector<16x32xf32>
    %41 = vector.extract_strided_slice %13 {offsets = [16, 0], sizes = [16, 128], strides = [1, 1]} : vector<128x128xf32> to vector<16x128xf32>
    %cst_18 = arith.constant dense<0.000000e+00> : vector<16x128xf32>
    %42 = tpu.matmul %37, %1, %cst_18 {dimension_numbers = #tpu.dot_dimension_numbers<[1], [0], [0], [1], [0, 0, 1, 1], [], []>} : vector<16x32xf32>, vector<32x128xf32>, vector<16x128xf32> -> vector<16x128xf32>
    %43 = arith.addf %41, %42 : vector<16x128xf32>
    %44 = math.tanh %43 : vector<16x128xf32>
    %cst_19 = arith.constant 5.000000e-01 : f32
    %45 = vector.broadcast %cst_19 : f32 to vector<16x128xf32>
    %46 = arith.mulf %45, %44 : vector<16x128xf32>
    %cst_20 = arith.constant 5.000000e-01 : f32
    %47 = vector.broadcast %cst_20 : f32 to vector<16x128xf32>
    %48 = arith.addf %46, %47 : vector<16x128xf32>
    %49 = vector.extract_strided_slice %48 {offsets = [0, 0], sizes = [16, 32], strides = [1, 1]} : vector<16x128xf32> to vector<16x32xf32>
    %50 = vector.extract_strided_slice %48 {offsets = [0, 32], sizes = [16, 32], strides = [1, 1]} : vector<16x128xf32> to vector<16x32xf32>
    %51 = vector.extract_strided_slice %48 {offsets = [0, 64], sizes = [16, 32], strides = [1, 1]} : vector<16x128xf32> to vector<16x32xf32>
    %52 = vector.extract_strided_slice %44 {offsets = [0, 96], sizes = [16, 32], strides = [1, 1]} : vector<16x128xf32> to vector<16x32xf32>
    %53 = arith.mulf %49, %52 : vector<16x32xf32>
    %54 = arith.mulf %51, %40 : vector<16x32xf32>
    %55 = arith.addf %53, %54 : vector<16x32xf32>
    %56 = math.tanh %55 : vector<16x32xf32>
    %57 = arith.mulf %50, %56 : vector<16x32xf32>
    %c1_i32 = arith.constant 1 : i32
    %58 = vector.broadcast %c1_i32 : i32 to vector<16x1xi32>
    %59 = arith.cmpi sgt, %9, %58 : vector<16x1xi32>
    %60 = vector.shape_cast %59 : vector<16x1xi1> to vector<16x1xi1>
    %61 = vector.broadcast %60 : vector<16x1xi1> to vector<16x32xi1>
    %62 = arith.select %61, %57, %37 : vector<16x32xi1>, vector<16x32xf32>
    %63 = vector.shape_cast %59 : vector<16x1xi1> to vector<16x1xi1>
    %64 = vector.broadcast %63 : vector<16x1xi1> to vector<16x32xi1>
    %65 = arith.select %64, %55, %40 : vector<16x32xi1>, vector<16x32xf32>
    %66 = vector.extract_strided_slice %13 {offsets = [32, 0], sizes = [16, 128], strides = [1, 1]} : vector<128x128xf32> to vector<16x128xf32>
    %cst_21 = arith.constant dense<0.000000e+00> : vector<16x128xf32>
    %67 = tpu.matmul %62, %1, %cst_21 {dimension_numbers = #tpu.dot_dimension_numbers<[1], [0], [0], [1], [0, 0, 1, 1], [], []>} : vector<16x32xf32>, vector<32x128xf32>, vector<16x128xf32> -> vector<16x128xf32>
    %68 = arith.addf %66, %67 : vector<16x128xf32>
    %69 = math.tanh %68 : vector<16x128xf32>
    %cst_22 = arith.constant 5.000000e-01 : f32
    %70 = vector.broadcast %cst_22 : f32 to vector<16x128xf32>
    %71 = arith.mulf %70, %69 : vector<16x128xf32>
    %cst_23 = arith.constant 5.000000e-01 : f32
    %72 = vector.broadcast %cst_23 : f32 to vector<16x128xf32>
    %73 = arith.addf %71, %72 : vector<16x128xf32>
    %74 = vector.extract_strided_slice %73 {offsets = [0, 0], sizes = [16, 32], strides = [1, 1]} : vector<16x128xf32> to vector<16x32xf32>
    %75 = vector.extract_strided_slice %73 {offsets = [0, 32], sizes = [16, 32], strides = [1, 1]} : vector<16x128xf32> to vector<16x32xf32>
    %76 = vector.extract_strided_slice %73 {offsets = [0, 64], sizes = [16, 32], strides = [1, 1]} : vector<16x128xf32> to vector<16x32xf32>
    %77 = vector.extract_strided_slice %69 {offsets = [0, 96], sizes = [16, 32], strides = [1, 1]} : vector<16x128xf32> to vector<16x32xf32>
    %78 = arith.mulf %74, %77 : vector<16x32xf32>
    %79 = arith.mulf %76, %65 : vector<16x32xf32>
    %80 = arith.addf %78, %79 : vector<16x32xf32>
    %81 = math.tanh %80 : vector<16x32xf32>
    %82 = arith.mulf %75, %81 : vector<16x32xf32>
    %c2_i32 = arith.constant 2 : i32
    %83 = vector.broadcast %c2_i32 : i32 to vector<16x1xi32>
    %84 = arith.cmpi sgt, %9, %83 : vector<16x1xi32>
    %85 = vector.shape_cast %84 : vector<16x1xi1> to vector<16x1xi1>
    %86 = vector.broadcast %85 : vector<16x1xi1> to vector<16x32xi1>
    %87 = arith.select %86, %82, %62 : vector<16x32xi1>, vector<16x32xf32>
    %88 = vector.shape_cast %84 : vector<16x1xi1> to vector<16x1xi1>
    %89 = vector.broadcast %88 : vector<16x1xi1> to vector<16x32xi1>
    %90 = arith.select %89, %80, %65 : vector<16x32xi1>, vector<16x32xf32>
    %91 = vector.extract_strided_slice %13 {offsets = [48, 0], sizes = [16, 128], strides = [1, 1]} : vector<128x128xf32> to vector<16x128xf32>
    %cst_24 = arith.constant dense<0.000000e+00> : vector<16x128xf32>
    %92 = tpu.matmul %87, %1, %cst_24 {dimension_numbers = #tpu.dot_dimension_numbers<[1], [0], [0], [1], [0, 0, 1, 1], [], []>} : vector<16x32xf32>, vector<32x128xf32>, vector<16x128xf32> -> vector<16x128xf32>
    %93 = arith.addf %91, %92 : vector<16x128xf32>
    %94 = math.tanh %93 : vector<16x128xf32>
    %cst_25 = arith.constant 5.000000e-01 : f32
    %95 = vector.broadcast %cst_25 : f32 to vector<16x128xf32>
    %96 = arith.mulf %95, %94 : vector<16x128xf32>
    %cst_26 = arith.constant 5.000000e-01 : f32
    %97 = vector.broadcast %cst_26 : f32 to vector<16x128xf32>
    %98 = arith.addf %96, %97 : vector<16x128xf32>
    %99 = vector.extract_strided_slice %98 {offsets = [0, 0], sizes = [16, 32], strides = [1, 1]} : vector<16x128xf32> to vector<16x32xf32>
    %100 = vector.extract_strided_slice %98 {offsets = [0, 32], sizes = [16, 32], strides = [1, 1]} : vector<16x128xf32> to vector<16x32xf32>
    %101 = vector.extract_strided_slice %98 {offsets = [0, 64], sizes = [16, 32], strides = [1, 1]} : vector<16x128xf32> to vector<16x32xf32>
    %102 = vector.extract_strided_slice %94 {offsets = [0, 96], sizes = [16, 32], strides = [1, 1]} : vector<16x128xf32> to vector<16x32xf32>
    %103 = arith.mulf %99, %102 : vector<16x32xf32>
    %104 = arith.mulf %101, %90 : vector<16x32xf32>
    %105 = arith.addf %103, %104 : vector<16x32xf32>
    %106 = math.tanh %105 : vector<16x32xf32>
    %107 = arith.mulf %100, %106 : vector<16x32xf32>
    %c3_i32 = arith.constant 3 : i32
    %108 = vector.broadcast %c3_i32 : i32 to vector<16x1xi32>
    %109 = arith.cmpi sgt, %9, %108 : vector<16x1xi32>
    %110 = vector.shape_cast %109 : vector<16x1xi1> to vector<16x1xi1>
    %111 = vector.broadcast %110 : vector<16x1xi1> to vector<16x32xi1>
    %112 = arith.select %111, %107, %87 : vector<16x32xi1>, vector<16x32xf32>
    %113 = vector.shape_cast %109 : vector<16x1xi1> to vector<16x1xi1>
    %114 = vector.broadcast %113 : vector<16x1xi1> to vector<16x32xi1>
    %115 = arith.select %114, %105, %90 : vector<16x32xi1>, vector<16x32xf32>
    %116 = vector.extract_strided_slice %13 {offsets = [64, 0], sizes = [16, 128], strides = [1, 1]} : vector<128x128xf32> to vector<16x128xf32>
    %cst_27 = arith.constant dense<0.000000e+00> : vector<16x128xf32>
    %117 = tpu.matmul %112, %1, %cst_27 {dimension_numbers = #tpu.dot_dimension_numbers<[1], [0], [0], [1], [0, 0, 1, 1], [], []>} : vector<16x32xf32>, vector<32x128xf32>, vector<16x128xf32> -> vector<16x128xf32>
    %118 = arith.addf %116, %117 : vector<16x128xf32>
    %119 = math.tanh %118 : vector<16x128xf32>
    %cst_28 = arith.constant 5.000000e-01 : f32
    %120 = vector.broadcast %cst_28 : f32 to vector<16x128xf32>
    %121 = arith.mulf %120, %119 : vector<16x128xf32>
    %cst_29 = arith.constant 5.000000e-01 : f32
    %122 = vector.broadcast %cst_29 : f32 to vector<16x128xf32>
    %123 = arith.addf %121, %122 : vector<16x128xf32>
    %124 = vector.extract_strided_slice %123 {offsets = [0, 0], sizes = [16, 32], strides = [1, 1]} : vector<16x128xf32> to vector<16x32xf32>
    %125 = vector.extract_strided_slice %123 {offsets = [0, 32], sizes = [16, 32], strides = [1, 1]} : vector<16x128xf32> to vector<16x32xf32>
    %126 = vector.extract_strided_slice %123 {offsets = [0, 64], sizes = [16, 32], strides = [1, 1]} : vector<16x128xf32> to vector<16x32xf32>
    %127 = vector.extract_strided_slice %119 {offsets = [0, 96], sizes = [16, 32], strides = [1, 1]} : vector<16x128xf32> to vector<16x32xf32>
    %128 = arith.mulf %124, %127 : vector<16x32xf32>
    %129 = arith.mulf %126, %115 : vector<16x32xf32>
    %130 = arith.addf %128, %129 : vector<16x32xf32>
    %131 = math.tanh %130 : vector<16x32xf32>
    %132 = arith.mulf %125, %131 : vector<16x32xf32>
    %c4_i32 = arith.constant 4 : i32
    %133 = vector.broadcast %c4_i32 : i32 to vector<16x1xi32>
    %134 = arith.cmpi sgt, %9, %133 : vector<16x1xi32>
    %135 = vector.shape_cast %134 : vector<16x1xi1> to vector<16x1xi1>
    %136 = vector.broadcast %135 : vector<16x1xi1> to vector<16x32xi1>
    %137 = arith.select %136, %132, %112 : vector<16x32xi1>, vector<16x32xf32>
    %138 = vector.shape_cast %134 : vector<16x1xi1> to vector<16x1xi1>
    %139 = vector.broadcast %138 : vector<16x1xi1> to vector<16x32xi1>
    %140 = arith.select %139, %130, %115 : vector<16x32xi1>, vector<16x32xf32>
    %141 = vector.extract_strided_slice %13 {offsets = [80, 0], sizes = [16, 128], strides = [1, 1]} : vector<128x128xf32> to vector<16x128xf32>
    %cst_30 = arith.constant dense<0.000000e+00> : vector<16x128xf32>
    %142 = tpu.matmul %137, %1, %cst_30 {dimension_numbers = #tpu.dot_dimension_numbers<[1], [0], [0], [1], [0, 0, 1, 1], [], []>} : vector<16x32xf32>, vector<32x128xf32>, vector<16x128xf32> -> vector<16x128xf32>
    %143 = arith.addf %141, %142 : vector<16x128xf32>
    %144 = math.tanh %143 : vector<16x128xf32>
    %cst_31 = arith.constant 5.000000e-01 : f32
    %145 = vector.broadcast %cst_31 : f32 to vector<16x128xf32>
    %146 = arith.mulf %145, %144 : vector<16x128xf32>
    %cst_32 = arith.constant 5.000000e-01 : f32
    %147 = vector.broadcast %cst_32 : f32 to vector<16x128xf32>
    %148 = arith.addf %146, %147 : vector<16x128xf32>
    %149 = vector.extract_strided_slice %148 {offsets = [0, 0], sizes = [16, 32], strides = [1, 1]} : vector<16x128xf32> to vector<16x32xf32>
    %150 = vector.extract_strided_slice %148 {offsets = [0, 32], sizes = [16, 32], strides = [1, 1]} : vector<16x128xf32> to vector<16x32xf32>
    %151 = vector.extract_strided_slice %148 {offsets = [0, 64], sizes = [16, 32], strides = [1, 1]} : vector<16x128xf32> to vector<16x32xf32>
    %152 = vector.extract_strided_slice %144 {offsets = [0, 96], sizes = [16, 32], strides = [1, 1]} : vector<16x128xf32> to vector<16x32xf32>
    %153 = arith.mulf %149, %152 : vector<16x32xf32>
    %154 = arith.mulf %151, %140 : vector<16x32xf32>
    %155 = arith.addf %153, %154 : vector<16x32xf32>
    %156 = math.tanh %155 : vector<16x32xf32>
    %157 = arith.mulf %150, %156 : vector<16x32xf32>
    %c5_i32 = arith.constant 5 : i32
    %158 = vector.broadcast %c5_i32 : i32 to vector<16x1xi32>
    %159 = arith.cmpi sgt, %9, %158 : vector<16x1xi32>
    %160 = vector.shape_cast %159 : vector<16x1xi1> to vector<16x1xi1>
    %161 = vector.broadcast %160 : vector<16x1xi1> to vector<16x32xi1>
    %162 = arith.select %161, %157, %137 : vector<16x32xi1>, vector<16x32xf32>
    %163 = vector.shape_cast %159 : vector<16x1xi1> to vector<16x1xi1>
    %164 = vector.broadcast %163 : vector<16x1xi1> to vector<16x32xi1>
    %165 = arith.select %164, %155, %140 : vector<16x32xi1>, vector<16x32xf32>
    %166 = vector.extract_strided_slice %13 {offsets = [96, 0], sizes = [16, 128], strides = [1, 1]} : vector<128x128xf32> to vector<16x128xf32>
    %cst_33 = arith.constant dense<0.000000e+00> : vector<16x128xf32>
    %167 = tpu.matmul %162, %1, %cst_33 {dimension_numbers = #tpu.dot_dimension_numbers<[1], [0], [0], [1], [0, 0, 1, 1], [], []>} : vector<16x32xf32>, vector<32x128xf32>, vector<16x128xf32> -> vector<16x128xf32>
    %168 = arith.addf %166, %167 : vector<16x128xf32>
    %169 = math.tanh %168 : vector<16x128xf32>
    %cst_34 = arith.constant 5.000000e-01 : f32
    %170 = vector.broadcast %cst_34 : f32 to vector<16x128xf32>
    %171 = arith.mulf %170, %169 : vector<16x128xf32>
    %cst_35 = arith.constant 5.000000e-01 : f32
    %172 = vector.broadcast %cst_35 : f32 to vector<16x128xf32>
    %173 = arith.addf %171, %172 : vector<16x128xf32>
    %174 = vector.extract_strided_slice %173 {offsets = [0, 0], sizes = [16, 32], strides = [1, 1]} : vector<16x128xf32> to vector<16x32xf32>
    %175 = vector.extract_strided_slice %173 {offsets = [0, 32], sizes = [16, 32], strides = [1, 1]} : vector<16x128xf32> to vector<16x32xf32>
    %176 = vector.extract_strided_slice %173 {offsets = [0, 64], sizes = [16, 32], strides = [1, 1]} : vector<16x128xf32> to vector<16x32xf32>
    %177 = vector.extract_strided_slice %169 {offsets = [0, 96], sizes = [16, 32], strides = [1, 1]} : vector<16x128xf32> to vector<16x32xf32>
    %178 = arith.mulf %174, %177 : vector<16x32xf32>
    %179 = arith.mulf %176, %165 : vector<16x32xf32>
    %180 = arith.addf %178, %179 : vector<16x32xf32>
    %181 = math.tanh %180 : vector<16x32xf32>
    %182 = arith.mulf %175, %181 : vector<16x32xf32>
    %c6_i32 = arith.constant 6 : i32
    %183 = vector.broadcast %c6_i32 : i32 to vector<16x1xi32>
    %184 = arith.cmpi sgt, %9, %183 : vector<16x1xi32>
    %185 = vector.shape_cast %184 : vector<16x1xi1> to vector<16x1xi1>
    %186 = vector.broadcast %185 : vector<16x1xi1> to vector<16x32xi1>
    %187 = arith.select %186, %182, %162 : vector<16x32xi1>, vector<16x32xf32>
    %188 = vector.shape_cast %184 : vector<16x1xi1> to vector<16x1xi1>
    %189 = vector.broadcast %188 : vector<16x1xi1> to vector<16x32xi1>
    %190 = arith.select %189, %180, %165 : vector<16x32xi1>, vector<16x32xf32>
    %191 = vector.extract_strided_slice %13 {offsets = [112, 0], sizes = [16, 128], strides = [1, 1]} : vector<128x128xf32> to vector<16x128xf32>
    %cst_36 = arith.constant dense<0.000000e+00> : vector<16x128xf32>
    %192 = tpu.matmul %187, %1, %cst_36 {dimension_numbers = #tpu.dot_dimension_numbers<[1], [0], [0], [1], [0, 0, 1, 1], [], []>} : vector<16x32xf32>, vector<32x128xf32>, vector<16x128xf32> -> vector<16x128xf32>
    %193 = arith.addf %191, %192 : vector<16x128xf32>
    %194 = math.tanh %193 : vector<16x128xf32>
    %cst_37 = arith.constant 5.000000e-01 : f32
    %195 = vector.broadcast %cst_37 : f32 to vector<16x128xf32>
    %196 = arith.mulf %195, %194 : vector<16x128xf32>
    %cst_38 = arith.constant 5.000000e-01 : f32
    %197 = vector.broadcast %cst_38 : f32 to vector<16x128xf32>
    %198 = arith.addf %196, %197 : vector<16x128xf32>
    %199 = vector.extract_strided_slice %198 {offsets = [0, 0], sizes = [16, 32], strides = [1, 1]} : vector<16x128xf32> to vector<16x32xf32>
    %200 = vector.extract_strided_slice %198 {offsets = [0, 32], sizes = [16, 32], strides = [1, 1]} : vector<16x128xf32> to vector<16x32xf32>
    %201 = vector.extract_strided_slice %198 {offsets = [0, 64], sizes = [16, 32], strides = [1, 1]} : vector<16x128xf32> to vector<16x32xf32>
    %202 = vector.extract_strided_slice %194 {offsets = [0, 96], sizes = [16, 32], strides = [1, 1]} : vector<16x128xf32> to vector<16x32xf32>
    %203 = arith.mulf %199, %202 : vector<16x32xf32>
    %204 = arith.mulf %201, %190 : vector<16x32xf32>
    %205 = arith.addf %203, %204 : vector<16x32xf32>
    %206 = math.tanh %205 : vector<16x32xf32>
    %207 = arith.mulf %200, %206 : vector<16x32xf32>
    %c7_i32 = arith.constant 7 : i32
    %208 = vector.broadcast %c7_i32 : i32 to vector<16x1xi32>
    %209 = arith.cmpi sgt, %9, %208 : vector<16x1xi32>
    %210 = vector.shape_cast %209 : vector<16x1xi1> to vector<16x1xi1>
    %211 = vector.broadcast %210 : vector<16x1xi1> to vector<16x32xi1>
    %212 = arith.select %211, %207, %187 : vector<16x32xi1>, vector<16x32xf32>
    %cst_39 = arith.constant dense<0.000000e+00> : vector<16x128xf32>
    %213 = tpu.matmul %212, %2, %cst_39 {dimension_numbers = #tpu.dot_dimension_numbers<[1], [0], [0], [1], [0, 0, 1, 1], [], []>} : vector<16x32xf32>, vector<32x128xf32>, vector<16x128xf32> -> vector<16x128xf32>
    %214 = vector.broadcast %4 : vector<1x128xf32> to vector<16x128xf32>
    %215 = arith.addf %213, %214 : vector<16x128xf32>
    %cst_40 = arith.constant 0.000000e+00 : f32
    %216 = vector.broadcast %cst_40 : f32 to vector<16x32xf32>
    %217 = math.tanh %215 : vector<16x128xf32>
    %cst_41 = arith.constant 5.000000e-01 : f32
    %218 = vector.broadcast %cst_41 : f32 to vector<16x128xf32>
    %219 = arith.mulf %218, %217 : vector<16x128xf32>
    %cst_42 = arith.constant 5.000000e-01 : f32
    %220 = vector.broadcast %cst_42 : f32 to vector<16x128xf32>
    %221 = arith.addf %219, %220 : vector<16x128xf32>
    %222 = vector.extract_strided_slice %221 {offsets = [0, 0], sizes = [16, 32], strides = [1, 1]} : vector<16x128xf32> to vector<16x32xf32>
    %223 = vector.extract_strided_slice %221 {offsets = [0, 32], sizes = [16, 32], strides = [1, 1]} : vector<16x128xf32> to vector<16x32xf32>
    %224 = vector.extract_strided_slice %221 {offsets = [0, 64], sizes = [16, 32], strides = [1, 1]} : vector<16x128xf32> to vector<16x32xf32>
    %225 = vector.extract_strided_slice %217 {offsets = [0, 96], sizes = [16, 32], strides = [1, 1]} : vector<16x128xf32> to vector<16x32xf32>
    %226 = arith.mulf %222, %225 : vector<16x32xf32>
    %227 = arith.mulf %224, %216 : vector<16x32xf32>
    %228 = arith.addf %226, %227 : vector<16x32xf32>
    %229 = math.tanh %228 : vector<16x32xf32>
    %230 = arith.mulf %223, %229 : vector<16x32xf32>
    %231 = vector.extract_strided_slice %230 {offsets = [0, 0], sizes = [8, 32], strides = [1, 1]} : vector<16x32xf32> to vector<8x32xf32>
    %232 = vector.extract_strided_slice %230 {offsets = [8, 0], sizes = [8, 32], strides = [1, 1]} : vector<16x32xf32> to vector<8x32xf32>
    %233 = arith.mulf %231, %232 : vector<8x32xf32>
    %234 = arith.subf %231, %232 : vector<8x32xf32>
    %235 = math.absf %234 : vector<8x32xf32>
    %236 = tpu.concatenate %233, %235 in 1 : vector<8x32xf32>, vector<8x32xf32> -> vector<8x64xf32>
    %cst_43 = arith.constant dense<0.000000e+00> : vector<8x128xf32>
    %237 = tpu.matmul %236, %5, %cst_43 {dimension_numbers = #tpu.dot_dimension_numbers<[1], [0], [0], [1], [0, 0, 1, 1], [], []>} : vector<8x64xf32>, vector<64x128xf32>, vector<8x128xf32> -> vector<8x128xf32>
    %238 = vector.broadcast %6 : vector<1x128xf32> to vector<8x128xf32>
    %239 = arith.addf %237, %238 : vector<8x128xf32>
    %240 = math.tanh %239 : vector<8x128xf32>
    %cst_44 = arith.constant 5.000000e-01 : f32
    %241 = vector.broadcast %cst_44 : f32 to vector<8x128xf32>
    %242 = arith.mulf %241, %240 : vector<8x128xf32>
    %cst_45 = arith.constant 5.000000e-01 : f32
    %243 = vector.broadcast %cst_45 : f32 to vector<8x128xf32>
    %244 = arith.addf %242, %243 : vector<8x128xf32>
    %cst_46 = arith.constant dense<0.000000e+00> : vector<8x128xf32>
    %245 = tpu.matmul %244, %7, %cst_46 {dimension_numbers = #tpu.dot_dimension_numbers<[1], [0], [0], [1], [0, 0, 1, 1], [], []>} : vector<8x128xf32>, vector<128x128xf32>, vector<8x128xf32> -> vector<8x128xf32>
    %246 = vector.broadcast %8 : vector<1x128xf32> to vector<8x128xf32>
    %247 = arith.addf %245, %246 : vector<8x128xf32>
    %cst_47 = arith.constant dense<0xFF800000> : vector<8xf32>
    %248 = vector.multi_reduction <maximumf>, %247, %cst_47 [1] : vector<8x128xf32> to vector<8xf32>
    %249 = vector.shape_cast %248 : vector<8xf32> to vector<8x1xf32>
    %250 = vector.broadcast %249 : vector<8x1xf32> to vector<8x128xf32>
    %251 = arith.subf %247, %250 : vector<8x128xf32>
    %252 = math.exp %251 : vector<8x128xf32>
    %cst_48 = arith.constant dense<0.000000e+00> : vector<8xf32>
    %253 = vector.multi_reduction <add>, %252, %cst_48 [1] : vector<8x128xf32> to vector<8xf32>
    %254 = vector.shape_cast %253 : vector<8xf32> to vector<8x1xf32>
    %255 = math.log %254 : vector<8x1xf32>
    %256 = vector.broadcast %255 : vector<8x1xf32> to vector<8x128xf32>
    %257 = arith.subf %251, %256 : vector<8x128xf32>
    %c0_49 = arith.constant 0 : index
    %c0_50 = arith.constant 0 : index
    %258 = vector.load %arg4[%c0_49, %c0_50] : memref<8x128xf32, #tpu.memory_space<vmem>>, vector<8x128xf32>
    tpu.vector_store %arg4[%c0_49, %c0_50], %257 {strides = array<i32>} : memref<8x128xf32, #tpu.memory_space<vmem>>, vector<8x128xf32>,
    return
  }
  func.func @transform_0(%arg0: i32) -> (i32, i32) {
    %c0_i32 = arith.constant 0 : i32
    %c0_i32_0 = arith.constant 0 : i32
    return %arg0, %c0_i32 : i32, i32
  }
  func.func @transform_1(%arg0: i32) -> (i32, i32) {
    %c0_i32 = arith.constant 0 : i32
    %c0_i32_0 = arith.constant 0 : i32
    return %arg0, %c0_i32 : i32, i32
  }
  func.func @transform_2(%arg0: i32) -> (i32, i32) {
    %c0_i32 = arith.constant 0 : i32
    %c0_i32_0 = arith.constant 0 : i32
    %c0_i32_1 = arith.constant 0 : i32
    return %c0_i32, %c0_i32_0 : i32, i32
  }
  func.func @transform_3(%arg0: i32) -> (i32, i32) {
    %c0_i32 = arith.constant 0 : i32
    %c0_i32_0 = arith.constant 0 : i32
    return %arg0, %c0_i32 : i32, i32
  }
}

</mosaic_0001>

<llo_original>
// kernel: pair_cross_lstm_forward.1
$region0: #{pair_cross_lstm_forward.1}
  #allocation0 [shape = 'u32[]', space=smem, size = 0x4, offset = 0x4, fixed_abs, tag = 'smem constant byte address 0x4 - core index']
  #allocation1 [shape = 'u32[72,128]{1,0:T(1,128)}', space=vmem, size = 0x9000, scoped, tag = 'internal scratch']
  %s0 = inlined_call_operand.vmem [shape: f32[256,16], index: 0, kind: input, shape index: {}]
  %s1 = inlined_call_operand.vmem [shape: s32[32,1], index: 1, kind: input, shape index: {}]
  %s2 = inlined_call_operand.hbm [shape: f32[336,128], index: 2, kind: input, shape index: {}]
  %s3 = inlined_call_operand.vmem [shape: f32[16,128], index: 3, kind: output, shape index: {}]
  %s4 = sld [smem:[#allocation0]]
  $region49: #{pair_cross_lstm_forward.1} parent=0
    _
  %s6 = ssub.s32 1, %s4
  %s7 = scalar_select 0, %s6, %s4
  $region1: #{pair_cross_lstm_forward.1} parent=0
    #allocation2 [shape = 'u8[172032]{0}', space=vmem, size = 0x2a000, scoped, tag = 'input window, operand 2, single buffered']
    #allocation3 [shape = 's32[2]{0}', space=sflag, size = 0x8, scoped, tag = 'scoped memory for pair_cross_lstm_forward.1']
    %8 = vsyncpa [#allocation3], 0
    loop: start=0, step=1, limit=4
    $region2: #{pair_cross_lstm_forward.1} parent=1 // loop_pre_header
      _
    $region3: #{pair_cross_lstm_forward.1} parent=1 // loop_header
      %s10 = sphi 0, %s14
      %p11 = scmp.ge.s32.totalorder %s10, 4
      %s20 = sphi 0, %s22
      %s23 = sphi 0, %s20
      %s24 = sphi 0, %s23
      %s40 = sphi 0, %s24
      %s46 = sphi 0, %s48
      %s49 = sphi 0, %s46
      %s50 = sphi 0, %s49
      %s66 = sphi 0, %s50
      %s70 = sphi 0, %s70
      %s72 = sphi 0, %s70
      %s73 = sphi 0, %s72
      %s87 = sphi 0, %s73
      %s93 = sphi 0, %s95
      %s96 = sphi 0, %s93
      %s97 = sphi 0, %s96
      %s113 = sphi 0, %s97
    $region4: #{pair_cross_lstm_forward.1} parent=1 // loop_header_branch
      %13 = sbr.rel (%p11) target = $region8
    $region5: #{pair_cross_lstm_forward.1} parent=1 // loop_body
      %s15 = ssub.s32 %s10, 1
      %s16 = ssub.s32 %s10, 2
      %s17 = sadd.s32 %s10, 1
      %s18 = ssub.s32 %s10, %s17
      %p19 = scmp.eq.s32.totalorder %s18, 0
      %s21 = sadd.s32 %s20, 1
      %s22 = scalar_select %p19, %s20, %s21
      %p25 = pneg %p19
      %p26 = scmp.eq.s32.totalorder %s10, 1
      %p27 = por %p25, %p26
      %p28 = scmp.ne.s32.totalorder %s20, %s23
      %p29 = scmp.eq.s32.totalorder %s10, 0
      %p30 = por %p28, %p29
      %p31 = scmp.ne.s32.totalorder %s20, %s23
      %p32 = scmp.eq.s32.totalorder %s15, 1
      %p33 = por %p31, %p32
      %p34 = scmp.ne.s32.totalorder %s23, %s24
      %p35 = scmp.eq.s32.totalorder %s15, 0
      %p36 = por %p34, %p35
      %p37 = scmp.ne.s32.totalorder %s23, %s24
      %p38 = scmp.eq.s32.totalorder %s16, 1
      %p39 = por %p37, %p38
      %p41 = scmp.ne.s32.totalorder %s24, %s40
      %p42 = scmp.eq.s32.totalorder %s16, 0
      %p43 = por %p41, %p42
      %s44 = ssub.s32 %s10, %s17
      %p45 = scmp.eq.s32.totalorder %s44, 0
      %s47 = sadd.s32 %s46, 1
      %s48 = scalar_select %p45, %s46, %s47
      %p51 = pneg %p45
      %p52 = scmp.eq.s32.totalorder %s10, 1
      %p53 = por %p51, %p52
      %p54 = scmp.ne.s32.totalorder %s46, %s49
      %p55 = scmp.eq.s32.totalorder %s10, 0
      %p56 = por %p54, %p55
      %p57 = scmp.ne.s32.totalorder %s46, %s49
      %p58 = scmp.eq.s32.totalorder %s15, 1
      %p59 = por %p57, %p58
      %p60 = scmp.ne.s32.totalorder %s49, %s50
      %p61 = scmp.eq.s32.totalorder %s15, 0
      %p62 = por %p60, %p61
      %p63 = scmp.ne.s32.totalorder %s49, %s50
      %p64 = scmp.eq.s32.totalorder %s16, 1
      %p65 = por %p63, %p64
      %p67 = scmp.ne.s32.totalorder %s50, %s66
      %p68 = scmp.eq.s32.totalorder %s16, 0
      %p69 = por %p67, %p68
      %s71 = sadd.s32 %s70, 1
      %p74 = scmp.eq.s32.totalorder %s10, 1
      %p75 = scmp.ne.s32.totalorder %s70, %s72
      %p76 = scmp.eq.s32.totalorder %s10, 0
      %p77 = por %p75, %p76
      %p78 = scmp.ne.s32.totalorder %s70, %s72
      %p79 = scmp.eq.s32.totalorder %s15, 1
      %p80 = por %p78, %p79
      %p81 = scmp.ne.s32.totalorder %s72, %s73
      %p82 = scmp.eq.s32.totalorder %s15, 0
      %p83 = por %p81, %p82
      %p84 = scmp.ne.s32.totalorder %s72, %s73
      %p85 = scmp.eq.s32.totalorder %s16, 1
      %p86 = por %p84, %p85
      %p88 = scmp.ne.s32.totalorder %s73, %s87
      %p89 = scmp.eq.s32.totalorder %s16, 0
      %p90 = por %p88, %p89
      %s91 = ssub.s32 %s10, %s17
      %p92 = scmp.eq.s32.totalorder %s91, 0
      %s94 = sadd.s32 %s93, 1
      %s95 = scalar_select %p92, %s93, %s94
      %p98 = pneg %p92
      %p99 = scmp.eq.s32.totalorder %s10, 1
      %p100 = por %p98, %p99
      %p101 = scmp.ne.s32.totalorder %s93, %s96
      %p102 = scmp.eq.s32.totalorder %s10, 0
      %p103 = por %p101, %p102
      %p104 = scmp.ne.s32.totalorder %s93, %s96
      %p105 = scmp.eq.s32.totalorder %s15, 1
      %p106 = por %p104, %p105
      %p107 = scmp.ne.s32.totalorder %s96, %s97
      %p108 = scmp.eq.s32.totalorder %s15, 0
      %p109 = por %p107, %p108
      %p110 = scmp.ne.s32.totalorder %s96, %s97
      %p111 = scmp.eq.s32.totalorder %s16, 1
      %p112 = por %p110, %p111
      %p114 = scmp.ne.s32.totalorder %s97, %s113
      %p115 = scmp.eq.s32.totalorder %s16, 0
      %p116 = por %p114, %p115
      %p117 = scmp.le.s32.totalorder 1, %s10
      %p118 = scmp.lt.s32.totalorder %s10, 3
      %p119 = pnand %p117, %p118
      %p120 = pneg %p119
      // Predicated region
      $region9: #{pair_cross_lstm_forward.1} parent=5 // pred_check
        _
      $region10: #{pair_cross_lstm_forward.1} parent=5 // pred_check_branch
        %122 = sbr.rel (%p119) target = $region12
      $region11: #{pair_cross_lstm_forward.1} parent=5 // pred_region
        %s123 = ssub.s32 %s10, 1
        // Predicated region
        $region13: #{pair_cross_lstm_forward.1} parent=11 // pred_check
          %p124 = pneg %p83
        $region14: #{pair_cross_lstm_forward.1} parent=11 // pred_check_branch
          %126 = sbr.rel (%p124) target = $region16
        $region15: #{pair_cross_lstm_forward.1} parent=11 // pred_region
          %128 = vsyncadd [#allocation3], 0
          %s129 = sshll.u32 %s2, 4
          %s130 = int_to_ptr.hbm [resolvable:$true] %s129
          %s131 = sshll.u32 [#allocation2], 4
          %s132 = int_to_ptr.vmem [resolvable:$true] %s131
          %137 = dma.hbm_to_vmem [thread:$0]  %s130, 5376, %s132, [#allocation3], 128, 128, 8
        $region16: #{pair_cross_lstm_forward.1} parent=11 // pred_fallthru
          _
      $region12: #{pair_cross_lstm_forward.1} parent=5 // pred_fallthru
        _
      %p138 = scmp.lt.s32.totalorder %s10, 2
      // Predicated region
      $region17: #{pair_cross_lstm_forward.1} parent=5 // pred_check
        %p139 = pneg %p138
      $region18: #{pair_cross_lstm_forward.1} parent=5 // pred_check_branch
        %141 = sbr.rel (%p139) target = $region20
      $region19: #{pair_cross_lstm_forward.1} parent=5 // pred_region
        // Predicated region
        $region21: #{pair_cross_lstm_forward.1} parent=19 // pred_check
          %p142 = pneg %p30
        $region22: #{pair_cross_lstm_forward.1} parent=19 // pred_check_branch
          %144 = sbr.rel (%p142) target = $region24
        $region23: #{pair_cross_lstm_forward.1} parent=19 // pred_region
          %s145 = smul.u32 16, %s10
          %p146 = scmp.lt.s32.totalorder %s145, 31
          %s147 = scalar_select %p146, %s145, 31
          %s148 = smul.addr %s147, 8
          %s149 = scalar_lea.vmem %s0, %s148
          %s150 = smul.u32 16, %s10
        $region24: #{pair_cross_lstm_forward.1} parent=19 // pred_fallthru
          _
        // Predicated region
        $region25: #{pair_cross_lstm_forward.1} parent=19 // pred_check
          %p151 = pneg %p56
        $region26: #{pair_cross_lstm_forward.1} parent=19 // pred_check_branch
          %153 = sbr.rel (%p151) target = $region28
        $region27: #{pair_cross_lstm_forward.1} parent=19 // pred_region
          %s154 = smul.u32 2, %s10
          %p155 = scmp.lt.s32.totalorder %s154, 3
          %s156 = scalar_select %p155, %s154, 3
          %s157 = smul.addr %s156, 8
          %s158 = scalar_lea.vmem %s1, %s157
          %s159 = smul.u32 2, %s10
        $region28: #{pair_cross_lstm_forward.1} parent=19 // pred_fallthru
          _
      $region20: #{pair_cross_lstm_forward.1} parent=5 // pred_fallthru
        _
      %p160 = scmp.le.s32.totalorder 1, %s10
      %p161 = scmp.lt.s32.totalorder %s10, 3
      %p162 = pnand %p160, %p161
      %p163 = pneg %p162
      // Predicated region
      $region29: #{pair_cross_lstm_forward.1} parent=5 // pred_check
        _
      $region30: #{pair_cross_lstm_forward.1} parent=5 // pred_check_branch
        %165 = sbr.rel (%p162) target = $region32
      $region31: #{pair_cross_lstm_forward.1} parent=5 // pred_region
        %s166 = ssub.s32 %s10, 1
        // Predicated region
        $region33: #{pair_cross_lstm_forward.1} parent=31 // pred_check
          %p167 = pneg %p83
        $region34: #{pair_cross_lstm_forward.1} parent=31 // pred_check_branch
          %169 = sbr.rel (%p167) target = $region36
        $region35: #{pair_cross_lstm_forward.1} parent=31 // pred_region
          %171 = dma.done [#allocation3], 5376
        $region36: #{pair_cross_lstm_forward.1} parent=31 // pred_fallthru
          _
        %s172 = smul.u32 16, %s15
        %p173 = scmp.lt.s32.totalorder %s172, 31
        %s174 = scalar_select %p173, %s172, 31
        %s175 = smul.addr %s174, 8
        %s176 = scalar_lea.vmem %s0, %s175
        %p177 = pneg %p36
        %p178 = pneg %p33
        %s179 = smul.u32 2, %s15
        %p180 = scmp.lt.s32.totalorder %s179, 3
        %s181 = scalar_select %p180, %s179, 3
        %s182 = smul.addr %s181, 8
        %s183 = scalar_lea.vmem %s1, %s182
        %p184 = pneg %p62
        %p185 = pneg %p59
        %p186 = pneg %p83
        %p187 = pneg %p80
        %p188 = pneg %p109
        %p189 = pneg %p106
        %p190 = scmp.lt.s32.totalorder %s15, 1
        %s191 = scalar_select %p190, %s15, 1
        %s192 = smul.addr %s191, 8
        %s193 = scalar_lea.vmem %s3, %s192
        %s194 = smul.u32 16, %s15
        %p195 = scmp.lt.s32.totalorder %s194, 31
        %s196 = scalar_select %p195, %s194, 31
        %s197 = smul.addr %s196, 8
        %s198 = scalar_lea.vmem %s0, %s197
        %s199 = smul.u32 16, %s15
        %s200 = smul.u32 2, %s15
        %p201 = scmp.lt.s32.totalorder %s200, 3
        %s202 = scalar_select %p201, %s200, 3
        %s203 = smul.addr %s202, 8
        %s204 = scalar_lea.vmem %s1, %s203
        %s205 = smul.u32 2, %s15
        %p206 = scmp.lt.s32.totalorder %s15, 1
        %s207 = scalar_select %p206, %s15, 1
        %s208 = smul.addr %s207, 8
        %s209 = scalar_lea.vmem %s3, %s208
        %v210 = vld [vmem:[#allocation2] sm:$0xff]
        %v211 = vld [vmem:[#allocation2 + $0x8] sm:$0xff]
        %v212 = vld [vmem:[#allocation2 + $0x10] sm:$0xff]
        %v213 = vld [vmem:[#allocation2 + $0x18] sm:$0xff]
        %v214 = vld [vmem:[#allocation2 + $0x20] sm:$0xff]
        %v215 = vld [vmem:[#allocation2 + $0x28] sm:$0xff]
        %v216 = vld [vmem:[#allocation2 + $0x30] sm:$0xff]
        %v217 = vld [vmem:[#allocation2 + $0x38] sm:$0xff]
        %v218 = vld [vmem:[#allocation2 + $0x40] sm:$0xff]
        %v219 = vld [vmem:[#allocation2 + $0x48] sm:$0xff]
        %v220 = vld [vmem:[#allocation2 + $0x50] sm:$0x1]
        %v221 = vld [vmem:[#allocation2 + $0x60] sm:$0x1]
        %v222 = vld [vmem:[#allocation2 + $0x70] sm:$0xff]
        %v223 = vld [vmem:[#allocation2 + $0x78] sm:$0xff]
        %v224 = vld [vmem:[#allocation2 + $0x80] sm:$0xff]
        %v225 = vld [vmem:[#allocation2 + $0x88] sm:$0xff]
        %v226 = vld [vmem:[#allocation2 + $0x90] sm:$0xff]
        %v227 = vld [vmem:[#allocation2 + $0x98] sm:$0xff]
        %v228 = vld [vmem:[#allocation2 + $0xa0] sm:$0xff]
        %v229 = vld [vmem:[#allocation2 + $0xa8] sm:$0xff]
        %v230 = vld [vmem:[#allocation2 + $0xb0] sm:$0x1]
        %v231 = vld [vmem:[#allocation2 + $0xc0] sm:$0xff]
        %v232 = vld [vmem:[#allocation2 + $0xc8] sm:$0xff]
        %v233 = vld [vmem:[#allocation2 + $0xd0] sm:$0xff]
        %v234 = vld [vmem:[#allocation2 + $0xd8] sm:$0xff]
        %v235 = vld [vmem:[#allocation2 + $0xe0] sm:$0xff]
        %v236 = vld [vmem:[#allocation2 + $0xe8] sm:$0xff]
        %v237 = vld [vmem:[#allocation2 + $0xf0] sm:$0xff]
        %v238 = vld [vmem:[#allocation2 + $0xf8] sm:$0xff]
        %v239 = vld [vmem:[#allocation2 + $0x100] sm:$0xff]
        %v240 = vld [vmem:[#allocation2 + $0x108] sm:$0xff]
        %v241 = vld [vmem:[#allocation2 + $0x110] sm:$0xff]
        %v242 = vld [vmem:[#allocation2 + $0x118] sm:$0xff]
        %v243 = vld [vmem:[#allocation2 + $0x120] sm:$0xff]
        %v244 = vld [vmem:[#allocation2 + $0x128] sm:$0xff]
        %v245 = vld [vmem:[#allocation2 + $0x130] sm:$0xff]
        %v246 = vld [vmem:[#allocation2 + $0x138] sm:$0xff]
        %v247 = vld [vmem:[#allocation2 + $0x140] sm:$0x1]
        %v248 = vld [vmem:[%s204] sm:$0xff]
        %v249 = vld [vmem:[%s204 + $0x8] sm:$0xff]
        %v250 = vld [vmem:[%s198] sm:$0xff]
        %v251 = vld [vmem:[%s198 + $0x8] sm:$0xff]
        %v252 = vld [vmem:[%s198 + $0x10] sm:$0xff]
        %v253 = vld [vmem:[%s198 + $0x18] sm:$0xff]
        %v254 = vld [vmem:[%s198 + $0x20] sm:$0xff]
        %v255 = vld [vmem:[%s198 + $0x28] sm:$0xff]
        %v256 = vld [vmem:[%s198 + $0x30] sm:$0xff]
        %v257 = vld [vmem:[%s198 + $0x38] sm:$0xff]
        %v258 = vld [vmem:[%s198 + $0x40] sm:$0xff]
        %v259 = vld [vmem:[%s198 + $0x48] sm:$0xff]
        %v260 = vld [vmem:[%s198 + $0x50] sm:$0xff]
        %v261 = vld [vmem:[%s198 + $0x58] sm:$0xff]
        %v262 = vld [vmem:[%s198 + $0x60] sm:$0xff]
        %v263 = vld [vmem:[%s198 + $0x68] sm:$0xff]
        %v264 = vld [vmem:[%s198 + $0x70] sm:$0xff]
        %v265 = vld [vmem:[%s198 + $0x78] sm:$0xff]
        %v266 = vperm.slane %v220, 0
        %vm267 = vcmask 130048
        %v269 = vsel %vm267, %v250, 0
        %v272 = vsel %vm267, %v251, 0
        %v275 = vsel %vm267, %v252, 0
        %v278 = vsel %vm267, %v253, 0
        %v281 = vsel %vm267, %v254, 0
        %v284 = vsel %vm267, %v255, 0
        %v287 = vsel %vm267, %v256, 0
        %v290 = vsel %vm267, %v257, 0
        %v293 = vsel %vm267, %v258, 0
        %v296 = vsel %vm267, %v259, 0
        %v299 = vsel %vm267, %v260, 0
        %v302 = vsel %vm267, %v261, 0
        %v305 = vsel %vm267, %v262, 0
        %v308 = vsel %vm267, %v263, 0
        %v311 = vsel %vm267, %v264, 0
        %v314 = vsel %vm267, %v265, 0
        %316 = vmatpush.msra.mxu0 0.0
        %317 = vmatpush.msra.mxu0 0.0
        %318 = vmatpush.msra.mxu0 0.0
        %319 = vmatpush.msra.mxu0 0.0
        %320 = vmatpush.msra.mxu0 0.0
        %321 = vmatpush.msra.mxu0 0.0
        %322 = vmatpush.msra.mxu0 0.0
        %323 = vmatpush.msra.mxu0 0.0
        %324 = vmatpush.msra.mxu0 0.0
        %325 = vmatpush.msra.mxu0 0.0
        %326 = vmatpush.msra.mxu0 0.0
        %327 = vmatpush.msra.mxu0 0.0
        %328 = vmatpush.msra.mxu0 0.0
        %329 = vmatpush.msra.mxu0 0.0
        %330 = vmatpush.msra.mxu0 %v211
        %331 = vmatpush.msra.mxu0 %v210
        %332 = vmatmul.f32.gmra.mxu0 %v269
        %v333 = vpop.f32.mrf.mxu0
        %v334 = vadd.f32 %v266, %v333
        %335 = vmatmul.f32.gmra.mxu0 %v272
        %v336 = vpop.f32.mrf.mxu0
        %v337 = vadd.f32 %v266, %v336
        %338 = vmatmul.f32.gmra.mxu0 %v275
        %v339 = vpop.f32.mrf.mxu0
        %v340 = vadd.f32 %v266, %v339
        %341 = vmatmul.f32.gmra.mxu0 %v278
        %v342 = vpop.f32.mrf.mxu0
        %v343 = vadd.f32 %v266, %v342
        %344 = vmatmul.f32.gmra.mxu0 %v281
        %v345 = vpop.f32.mrf.mxu0
        %v346 = vadd.f32 %v266, %v345
        %347 = vmatmul.f32.gmra.mxu0 %v284
        %v348 = vpop.f32.mrf.mxu0
        %v349 = vadd.f32 %v266, %v348
        %350 = vmatmul.f32.gmra.mxu0 %v287
        %v351 = vpop.f32.mrf.mxu0
        %v352 = vadd.f32 %v266, %v351
        %353 = vmatmul.f32.gmra.mxu0 %v290
        %v354 = vpop.f32.mrf.mxu0
        %v355 = vadd.f32 %v266, %v354
        %356 = vmatmul.f32.gmra.mxu0 %v293
        %v357 = vpop.f32.mrf.mxu0
        %v358 = vadd.f32 %v266, %v357
        %359 = vmatmul.f32.gmra.mxu0 %v296
        %v360 = vpop.f32.mrf.mxu0
        %v361 = vadd.f32 %v266, %v360
        %362 = vmatmul.f32.gmra.mxu0 %v299
        %v363 = vpop.f32.mrf.mxu0
        %v364 = vadd.f32 %v266, %v363
        %365 = vmatmul.f32.gmra.mxu0 %v302
        %v366 = vpop.f32.mrf.mxu0
        %v367 = vadd.f32 %v266, %v366
        %368 = vmatmul.f32.gmra.mxu0 %v305
        %v369 = vpop.f32.mrf.mxu0
        %v370 = vadd.f32 %v266, %v369
        %371 = vmatmul.f32.gmra.mxu0 %v308
        %v372 = vpop.f32.mrf.mxu0
        %v373 = vadd.f32 %v266, %v372
        %374 = vmatmul.f32.gmra.mxu0 %v311
        %v375 = vpop.f32.mrf.mxu0
        %v376 = vadd.f32 %v266, %v375
        %377 = vmatmul.f32.gmra.mxu0 %v314
        %v378 = vpop.f32.mrf.mxu0
        %v379 = vadd.f32 %v266, %v378
        %380 = vdwg.mxu0
        %vm381 = vcmask 261120
        %v383 = vsel %vm381, 0.0, 0
        %385 = vmatpush.msra.mxu0 0.0
        %386 = vmatpush.msra.mxu0 0.0
        %387 = vmatpush.msra.mxu0 0.0
        %388 = vmatpush.msra.mxu0 0.0
        %389 = vmatpush.msra.mxu0 0.0
        %390 = vmatpush.msra.mxu0 0.0
        %391 = vmatpush.msra.mxu0 0.0
        %392 = vmatpush.msra.mxu0 0.0
        %393 = vmatpush.msra.mxu0 0.0
        %394 = vmatpush.msra.mxu0 0.0
        %395 = vmatpush.msra.mxu0 0.0
        %396 = vmatpush.msra.mxu0 0.0
        %397 = vmatpush.msra.mxu0 %v215
        %398 = vmatpush.msra.mxu0 %v214
        %399 = vmatpush.msra.mxu0 %v213
        %400 = vmatpush.msra.mxu0 %v212
        %401 = vmatmul.f32.gmra.mxu0 %v383
        %v402 = vpop.f32.mrf.mxu0
        %v403 = vadd.f32 0.0, %v402
        %404 = vmatmul.f32.gmra.mxu0 %v383
        %v405 = vpop.f32.mrf.mxu0
        %v406 = vadd.f32 0.0, %v405
        %407 = vdwg.mxu0
        %v408 = vadd.f32 %v334, %v403
        %v409 = vadd.f32 %v337, %v406
        %v410 = vtanh.pop %v408
        %v411 = vtanh.pop %v409
        %v412 = vmul.f32 %v410, 0.5
        %v413 = vmul.f32 %v411, 0.5
        %v414 = vadd.f32 %v412, 0.5
        %v415 = vadd.f32 %v413, 0.5
        %418 = vrot.lane.b32.xlu0 %v410, 32
        %v419 = vpop.permute.xlu0 %418
        %420 = vrot.lane.b32.xlu0 %v411, 32
        %v421 = vpop.permute.xlu0 %420
        %v424 = vmul.f32 %v414, %v419
        %v425 = vmul.f32 %v415, %v421
        %v426 = vmul.f32 %v414, 0.0
        %v427 = vmul.f32 %v415, 0.0
        %430 = vrot.lane.b32.xlu0 %v426, 64
        %v431 = vpop.permute.xlu0 %430
        %432 = vrot.lane.b32.xlu0 %v427, 64
        %v433 = vpop.permute.xlu0 %432
        %v436 = vadd.f32 %v424, %v431
        %v437 = vadd.f32 %v425, %v433
        %v438 = vtanh.pop %v436
        %v439 = vtanh.pop %v437
        %442 = vrot.lane.b32.xlu0 %v438, 32
        %v443 = vpop.permute.xlu0 %442
        %444 = vrot.lane.b32.xlu0 %v439, 32
        %v445 = vpop.permute.xlu0 %444
        %v448 = vmul.f32 %v414, %v443
        %v449 = vmul.f32 %v415, %v445
        %vm450 = vcmp.gt.s32.totalorder %v248, 0
        %vm451 = vcmp.gt.s32.totalorder %v249, 0
        %v452 = vsel %vm450, 1, 0
        %v453 = vsel %vm451, 1, 0
        %454 = vset.pattern.permute.xlu0 0
        %455 = vperm.xlu0 %454, %v452
        %v456 = vpop.permute.xlu0 %455
        %457 = vset.pattern.permute.xlu0 0
        %458 = vperm.xlu0 %457, %v453
        %v459 = vpop.permute.xlu0 %458
        %vm460 = vcmp.eq.s32.totalorder %v456, 1
        %vm461 = vcmp.eq.s32.totalorder %v459, 1
        %v462 = vsel %vm460, %v448, 0.0
        %v463 = vsel %vm461, %v449, 0.0
        %v464 = vsel %vm460, %v436, 0.0
        %v465 = vsel %vm461, %v437, 0.0
        %468 = vrot.lane.b32.xlu0 %v462, 96
        %v469 = vpop.permute.xlu0 %468
        %470 = vrot.lane.b32.xlu0 %v463, 96
        %v471 = vpop.permute.xlu0 %470
        %v472 = vsel %vm381, %v469, 0
        %v474 = vsel %vm381, %v471, 0
        %476 = vmatpush.msra.mxu0 0.0
        %477 = vmatpush.msra.mxu0 0.0
        %478 = vmatpush.msra.mxu0 0.0
        %479 = vmatpush.msra.mxu0 0.0
        %480 = vmatpush.msra.mxu0 0.0
        %481 = vmatpush.msra.mxu0 0.0
        %482 = vmatpush.msra.mxu0 0.0
        %483 = vmatpush.msra.mxu0 0.0
        %484 = vmatpush.msra.mxu0 0.0
        %485 = vmatpush.msra.mxu0 0.0
        %486 = vmatpush.msra.mxu0 0.0
        %487 = vmatpush.msra.mxu0 0.0
        %488 = vmatpush.msra.mxu0 %v215
        %489 = vmatpush.msra.mxu0 %v214
        %490 = vmatpush.msra.mxu0 %v213
        %491 = vmatpush.msra.mxu0 %v212
        %492 = vmatmul.f32.gmra.mxu0 %v472
        %v493 = vpop.f32.mrf.mxu0
        %v494 = vadd.f32 0.0, %v493
        %495 = vmatmul.f32.gmra.mxu0 %v474
        %v496 = vpop.f32.mrf.mxu0
        %v497 = vadd.f32 0.0, %v496
        %498 = vdwg.mxu0
        %v499 = vadd.f32 %v340, %v494
        %v500 = vadd.f32 %v343, %v497
        %v501 = vtanh.pop %v499
        %v502 = vtanh.pop %v500
        %v503 = vmul.f32 %v501, 0.5
        %v504 = vmul.f32 %v502, 0.5
        %v505 = vadd.f32 %v503, 0.5
        %v506 = vadd.f32 %v504, 0.5
        %509 = vrot.lane.b32.xlu0 %v501, 32
        %v510 = vpop.permute.xlu0 %509
        %511 = vrot.lane.b32.xlu0 %v502, 32
        %v512 = vpop.permute.xlu0 %511
        %v515 = vmul.f32 %v505, %v510
        %v516 = vmul.f32 %v506, %v512
        %519 = vrot.lane.b32.xlu0 %v464, 64
        %v520 = vpop.permute.xlu0 %519
        %521 = vrot.lane.b32.xlu0 %v465, 64
        %v522 = vpop.permute.xlu0 %521
        %v525 = vmul.f32 %v505, %v520
        %v526 = vmul.f32 %v506, %v522
        %529 = vrot.lane.b32.xlu0 %v525, 64
        %v530 = vpop.permute.xlu0 %529
        %531 = vrot.lane.b32.xlu0 %v526, 64
        %v532 = vpop.permute.xlu0 %531
        %v535 = vadd.f32 %v515, %v530
        %v536 = vadd.f32 %v516, %v532
        %v537 = vtanh.pop %v535
        %v538 = vtanh.pop %v536
        %541 = vrot.lane.b32.xlu0 %v537, 32
        %v542 = vpop.permute.xlu0 %541
        %543 = vrot.lane.b32.xlu0 %v538, 32
        %v544 = vpop.permute.xlu0 %543
        %v547 = vmul.f32 %v505, %v542
        %v548 = vmul.f32 %v506, %v544
        %vm549 = vcmp.gt.s32.totalorder %v248, 1
        %vm550 = vcmp.gt.s32.totalorder %v249, 1
        %v551 = vsel %vm549, 1, 0
        %v552 = vsel %vm550, 1, 0
        %553 = vset.pattern.permute.xlu0 0
        %554 = vperm.xlu0 %553, %v551
        %v555 = vpop.permute.xlu0 %554
        %556 = vset.pattern.permute.xlu0 0
        %557 = vperm.xlu0 %556, %v552
        %v558 = vpop.permute.xlu0 %557
        %vm559 = vcmp.eq.s32.totalorder %v555, 1
        %vm560 = vcmp.eq.s32.totalorder %v558, 1
        %v561 = vsel %vm559, %v547, %v462
        %v562 = vsel %vm560, %v548, %v463
        %v563 = vsel %vm559, %v535, %v464
        %v564 = vsel %vm560, %v536, %v465
        %567 = vrot.lane.b32.xlu0 %v561, 96
        %v568 = vpop.permute.xlu0 %567
        %569 = vrot.lane.b32.xlu0 %v562, 96
        %v570 = vpop.permute.xlu0 %569
        %v571 = vsel %vm381, %v568, 0
        %v573 = vsel %vm381, %v570, 0
        %575 = vmatpush.msra.mxu0 0.0
        %576 = vmatpush.msra.mxu0 0.0
        %577 = vmatpush.msra.mxu0 0.0
        %578 = vmatpush.msra.mxu0 0.0
        %579 = vmatpush.msra.mxu0 0.0
        %580 = vmatpush.msra.mxu0 0.0
        %581 = vmatpush.msra.mxu0 0.0
        %582 = vmatpush.msra.mxu0 0.0
        %583 = vmatpush.msra.mxu0 0.0
        %584 = vmatpush.msra.mxu0 0.0
        %585 = vmatpush.msra.mxu0 0.0
        %586 = vmatpush.msra.mxu0 0.0
        %587 = vmatpush.msra.mxu0 %v215
        %588 = vmatpush.msra.mxu0 %v214
        %589 = vmatpush.msra.mxu0 %v213
        %590 = vmatpush.msra.mxu0 %v212
        %591 = vmatmul.f32.gmra.mxu0 %v571
        %v592 = vpop.f32.mrf.mxu0
        %v593 = vadd.f32 0.0, %v592
        %594 = vmatmul.f32.gmra.mxu0 %v573
        %v595 = vpop.f32.mrf.mxu0
        %v596 = vadd.f32 0.0, %v595
        %597 = vdwg.mxu0
        %v598 = vadd.f32 %v346, %v593
        %v599 = vadd.f32 %v349, %v596
        %v600 = vtanh.pop %v598
        %v601 = vtanh.pop %v599
        %v602 = vmul.f32 %v600, 0.5
        %v603 = vmul.f32 %v601, 0.5
        %v604 = vadd.f32 %v602, 0.5
        %v605 = vadd.f32 %v603, 0.5
        %608 = vrot.lane.b32.xlu0 %v600, 32
        %v609 = vpop.permute.xlu0 %608
        %610 = vrot.lane.b32.xlu0 %v601, 32
        %v611 = vpop.permute.xlu0 %610
        %v614 = vmul.f32 %v604, %v609
        %v615 = vmul.f32 %v605, %v611
        %618 = vrot.lane.b32.xlu0 %v563, 64
        %v619 = vpop.permute.xlu0 %618
        %620 = vrot.lane.b32.xlu0 %v564, 64
        %v621 = vpop.permute.xlu0 %620
        %v624 = vmul.f32 %v604, %v619
        %v625 = vmul.f32 %v605, %v621
        %628 = vrot.lane.b32.xlu0 %v624, 64
        %v629 = vpop.permute.xlu0 %628
        %630 = vrot.lane.b32.xlu0 %v625, 64
        %v631 = vpop.permute.xlu0 %630
        %v634 = vadd.f32 %v614, %v629
        %v635 = vadd.f32 %v615, %v631
        %v636 = vtanh.pop %v634
        %v637 = vtanh.pop %v635
        %640 = vrot.lane.b32.xlu0 %v636, 32
        %v641 = vpop.permute.xlu0 %640
        %642 = vrot.lane.b32.xlu0 %v637, 32
        %v643 = vpop.permute.xlu0 %642
        %v646 = vmul.f32 %v604, %v641
        %v647 = vmul.f32 %v605, %v643
        %vm648 = vcmp.gt.s32.totalorder %v248, 2
        %vm649 = vcmp.gt.s32.totalorder %v249, 2
        %v650 = vsel %vm648, 1, 0
        %v651 = vsel %vm649, 1, 0
        %652 = vset.pattern.permute.xlu0 0
        %653 = vperm.xlu0 %652, %v650
        %v654 = vpop.permute.xlu0 %653
        %655 = vset.pattern.permute.xlu0 0
        %656 = vperm.xlu0 %655, %v651
        %v657 = vpop.permute.xlu0 %656
        %vm658 = vcmp.eq.s32.totalorder %v654, 1
        %vm659 = vcmp.eq.s32.totalorder %v657, 1
        %v660 = vsel %vm658, %v646, %v561
        %v661 = vsel %vm659, %v647, %v562
        %v662 = vsel %vm658, %v634, %v563
        %v663 = vsel %vm659, %v635, %v564
        %666 = vrot.lane.b32.xlu0 %v660, 96
        %v667 = vpop.permute.xlu0 %666
        %668 = vrot.lane.b32.xlu0 %v661, 96
        %v669 = vpop.permute.xlu0 %668
        %v670 = vsel %vm381, %v667, 0
        %v672 = vsel %vm381, %v669, 0
        %674 = vmatpush.msra.mxu0 0.0
        %675 = vmatpush.msra.mxu0 0.0
        %676 = vmatpush.msra.mxu0 0.0
        %677 = vmatpush.msra.mxu0 0.0
        %678 = vmatpush.msra.mxu0 0.0
        %679 = vmatpush.msra.mxu0 0.0
        %680 = vmatpush.msra.mxu0 0.0
        %681 = vmatpush.msra.mxu0 0.0
        %682 = vmatpush.msra.mxu0 0.0
        %683 = vmatpush.msra.mxu0 0.0
        %684 = vmatpush.msra.mxu0 0.0
        %685 = vmatpush.msra.mxu0 0.0
        %686 = vmatpush.msra.mxu0 %v215
        %687 = vmatpush.msra.mxu0 %v214
        %688 = vmatpush.msra.mxu0 %v213
        %689 = vmatpush.msra.mxu0 %v212
        %690 = vmatmul.f32.gmra.mxu0 %v670
        %v691 = vpop.f32.mrf.mxu0
        %v692 = vadd.f32 0.0, %v691
        %693 = vmatmul.f32.gmra.mxu0 %v672
        %v694 = vpop.f32.mrf.mxu0
        %v695 = vadd.f32 0.0, %v694
        %696 = vdwg.mxu0
        %v697 = vadd.f32 %v352, %v692
        %v698 = vadd.f32 %v355, %v695
        %v699 = vtanh.pop %v697
        %v700 = vtanh.pop %v698
        %v701 = vmul.f32 %v699, 0.5
        %v702 = vmul.f32 %v700, 0.5
        %v703 = vadd.f32 %v701, 0.5
        %v704 = vadd.f32 %v702, 0.5
        %707 = vrot.lane.b32.xlu0 %v699, 32
        %v708 = vpop.permute.xlu0 %707
        %709 = vrot.lane.b32.xlu0 %v700, 32
        %v710 = vpop.permute.xlu0 %709
        %v713 = vmul.f32 %v703, %v708
        %v714 = vmul.f32 %v704, %v710
        %717 = vrot.lane.b32.xlu0 %v662, 64
        %v718 = vpop.permute.xlu0 %717
        %719 = vrot.lane.b32.xlu0 %v663, 64
        %v720 = vpop.permute.xlu0 %719
        %v723 = vmul.f32 %v703, %v718
        %v724 = vmul.f32 %v704, %v720
        %727 = vrot.lane.b32.xlu0 %v723, 64
        %v728 = vpop.permute.xlu0 %727
        %729 = vrot.lane.b32.xlu0 %v724, 64
        %v730 = vpop.permute.xlu0 %729
        %v733 = vadd.f32 %v713, %v728
        %v734 = vadd.f32 %v714, %v730
        %v735 = vtanh.pop %v733
        %v736 = vtanh.pop %v734
        %739 = vrot.lane.b32.xlu0 %v735, 32
        %v740 = vpop.permute.xlu0 %739
        %741 = vrot.lane.b32.xlu0 %v736, 32
        %v742 = vpop.permute.xlu0 %741
        %v745 = vmul.f32 %v703, %v740
        %v746 = vmul.f32 %v704, %v742
        %vm747 = vcmp.gt.s32.totalorder %v248, 3
        %vm748 = vcmp.gt.s32.totalorder %v249, 3
        %v749 = vsel %vm747, 1, 0
        %v750 = vsel %vm748, 1, 0
        %751 = vset.pattern.permute.xlu0 0
        %752 = vperm.xlu0 %751, %v749
        %v753 = vpop.permute.xlu0 %752
        %754 = vset.pattern.permute.xlu0 0
        %755 = vperm.xlu0 %754, %v750
        %v756 = vpop.permute.xlu0 %755
        %vm757 = vcmp.eq.s32.totalorder %v753, 1
        %vm758 = vcmp.eq.s32.totalorder %v756, 1
        %v759 = vsel %vm757, %v745, %v660
        %v760 = vsel %vm758, %v746, %v661
        %v761 = vsel %vm757, %v733, %v662
        %v762 = vsel %vm758, %v734, %v663
        %765 = vrot.lane.b32.xlu0 %v759, 96
        %v766 = vpop.permute.xlu0 %765
        %767 = vrot.lane.b32.xlu0 %v760, 96
        %v768 = vpop.permute.xlu0 %767
        %v769 = vsel %vm381, %v766, 0
        %v771 = vsel %vm381, %v768, 0
        %773 = vmatpush.msra.mxu0 0.0
        %774 = vmatpush.msra.mxu0 0.0
        %775 = vmatpush.msra.mxu0 0.0
        %776 = vmatpush.msra.mxu0 0.0
        %777 = vmatpush.msra.mxu0 0.0
        %778 = vmatpush.msra.mxu0 0.0
        %779 = vmatpush.msra.mxu0 0.0
        %780 = vmatpush.msra.mxu0 0.0
        %781 = vmatpush.msra.mxu0 0.0
        %782 = vmatpush.msra.mxu0 0.0
        %783 = vmatpush.msra.mxu0 0.0
        %784 = vmatpush.msra.mxu0 0.0
        %785 = vmatpush.msra.mxu0 %v215
        %786 = vmatpush.msra.mxu0 %v214
        %787 = vmatpush.msra.mxu0 %v213
        %788 = vmatpush.msra.mxu0 %v212
        %789 = vmatmul.f32.gmra.mxu0 %v769
        %v790 = vpop.f32.mrf.mxu0
        %v791 = vadd.f32 0.0, %v790
        %792 = vmatmul.f32.gmra.mxu0 %v771
        %v793 = vpop.f32.mrf.mxu0
        %v794 = vadd.f32 0.0, %v793
        %795 = vdwg.mxu0
        %v796 = vadd.f32 %v358, %v791
        %v797 = vadd.f32 %v361, %v794
        %v798 = vtanh.pop %v796
        %v799 = vtanh.pop %v797
        %v800 = vmul.f32 %v798, 0.5
        %v801 = vmul.f32 %v799, 0.5
        %v802 = vadd.f32 %v800, 0.5
        %v803 = vadd.f32 %v801, 0.5
        %806 = vrot.lane.b32.xlu0 %v798, 32
        %v807 = vpop.permute.xlu0 %806
        %808 = vrot.lane.b32.xlu0 %v799, 32
        %v809 = vpop.permute.xlu0 %808
        %v812 = vmul.f32 %v802, %v807
        %v813 = vmul.f32 %v803, %v809
        %816 = vrot.lane.b32.xlu0 %v761, 64
        %v817 = vpop.permute.xlu0 %816
        %818 = vrot.lane.b32.xlu0 %v762, 64
        %v819 = vpop.permute.xlu0 %818
        %v822 = vmul.f32 %v802, %v817
        %v823 = vmul.f32 %v803, %v819
        %826 = vrot.lane.b32.xlu0 %v822, 64
        %v827 = vpop.permute.xlu0 %826
        %828 = vrot.lane.b32.xlu0 %v823, 64
        %v829 = vpop.permute.xlu0 %828
        %v832 = vadd.f32 %v812, %v827
        %v833 = vadd.f32 %v813, %v829
        %v834 = vtanh.pop %v832
        %v835 = vtanh.pop %v833
        %838 = vrot.lane.b32.xlu0 %v834, 32
        %v839 = vpop.permute.xlu0 %838
        %840 = vrot.lane.b32.xlu0 %v835, 32
        %v841 = vpop.permute.xlu0 %840
        %v844 = vmul.f32 %v802, %v839
        %v845 = vmul.f32 %v803, %v841
        %vm846 = vcmp.gt.s32.totalorder %v248, 4
        %vm847 = vcmp.gt.s32.totalorder %v249, 4
        %v848 = vsel %vm846, 1, 0
        %v849 = vsel %vm847, 1, 0
        %850 = vset.pattern.permute.xlu0 0
        %851 = vperm.xlu0 %850, %v848
        %v852 = vpop.permute.xlu0 %851
        %853 = vset.pattern.permute.xlu0 0
        %854 = vperm.xlu0 %853, %v849
        %v855 = vpop.permute.xlu0 %854
        %vm856 = vcmp.eq.s32.totalorder %v852, 1
        %vm857 = vcmp.eq.s32.totalorder %v855, 1
        %v858 = vsel %vm856, %v844, %v759
        %v859 = vsel %vm857, %v845, %v760
        %v860 = vsel %vm856, %v832, %v761
        %v861 = vsel %vm857, %v833, %v762
        %864 = vrot.lane.b32.xlu0 %v858, 96
        %v865 = vpop.permute.xlu0 %864
        %866 = vrot.lane.b32.xlu0 %v859, 96
        %v867 = vpop.permute.xlu0 %866
        %v868 = vsel %vm381, %v865, 0
        %v870 = vsel %vm381, %v867, 0
        %872 = vmatpush.msra.mxu0 0.0
        %873 = vmatpush.msra.mxu0 0.0
        %874 = vmatpush.msra.mxu0 0.0
        %875 = vmatpush.msra.mxu0 0.0
        %876 = vmatpush.msra.mxu0 0.0
        %877 = vmatpush.msra.mxu0 0.0
        %878 = vmatpush.msra.mxu0 0.0
        %879 = vmatpush.msra.mxu0 0.0
        %880 = vmatpush.msra.mxu0 0.0
        %881 = vmatpush.msra.mxu0 0.0
        %882 = vmatpush.msra.mxu0 0.0
        %883 = vmatpush.msra.mxu0 0.0
        %884 = vmatpush.msra.mxu0 %v215
        %885 = vmatpush.msra.mxu0 %v214
        %886 = vmatpush.msra.mxu0 %v213
        %887 = vmatpush.msra.mxu0 %v212
        %888 = vmatmul.f32.gmra.mxu0 %v868
        %v889 = vpop.f32.mrf.mxu0
        %v890 = vadd.f32 0.0, %v889
        %891 = vmatmul.f32.gmra.mxu0 %v870
        %v892 = vpop.f32.mrf.mxu0
        %v893 = vadd.f32 0.0, %v892
        %894 = vdwg.mxu0
        %v895 = vadd.f32 %v364, %v890
        %v896 = vadd.f32 %v367, %v893
        %v897 = vtanh.pop %v895
        %v898 = vtanh.pop %v896
        %v899 = vmul.f32 %v897, 0.5
        %v900 = vmul.f32 %v898, 0.5
        %v901 = vadd.f32 %v899, 0.5
        %v902 = vadd.f32 %v900, 0.5
        %905 = vrot.lane.b32.xlu0 %v897, 32
        %v906 = vpop.permute.xlu0 %905
        %907 = vrot.lane.b32.xlu0 %v898, 32
        %v908 = vpop.permute.xlu0 %907
        %v911 = vmul.f32 %v901, %v906
        %v912 = vmul.f32 %v902, %v908
        %915 = vrot.lane.b32.xlu0 %v860, 64
        %v916 = vpop.permute.xlu0 %915
        %917 = vrot.lane.b32.xlu0 %v861, 64
        %v918 = vpop.permute.xlu0 %917
        %v921 = vmul.f32 %v901, %v916
        %v922 = vmul.f32 %v902, %v918
        %925 = vrot.lane.b32.xlu0 %v921, 64
        %v926 = vpop.permute.xlu0 %925
        %927 = vrot.lane.b32.xlu0 %v922, 64
        %v928 = vpop.permute.xlu0 %927
        %v931 = vadd.f32 %v911, %v926
        %v932 = vadd.f32 %v912, %v928
        %v933 = vtanh.pop %v931
        %v934 = vtanh.pop %v932
        %937 = vrot.lane.b32.xlu0 %v933, 32
        %v938 = vpop.permute.xlu0 %937
        %939 = vrot.lane.b32.xlu0 %v934, 32
        %v940 = vpop.permute.xlu0 %939
        %v943 = vmul.f32 %v901, %v938
        %v944 = vmul.f32 %v902, %v940
        %vm945 = vcmp.gt.s32.totalorder %v248, 5
        %vm946 = vcmp.gt.s32.totalorder %v249, 5
        %v947 = vsel %vm945, 1, 0
        %v948 = vsel %vm946, 1, 0
        %949 = vset.pattern.permute.xlu0 0
        %950 = vperm.xlu0 %949, %v947
        %v951 = vpop.permute.xlu0 %950
        %952 = vset.pattern.permute.xlu0 0
        %953 = vperm.xlu0 %952, %v948
        %v954 = vpop.permute.xlu0 %953
        %vm955 = vcmp.eq.s32.totalorder %v951, 1
        %vm956 = vcmp.eq.s32.totalorder %v954, 1
        %v957 = vsel %vm955, %v943, %v858
        %v958 = vsel %vm956, %v944, %v859
        %v959 = vsel %vm955, %v931, %v860
        %v960 = vsel %vm956, %v932, %v861
        %963 = vrot.lane.b32.xlu0 %v957, 96
        %v964 = vpop.permute.xlu0 %963
        %965 = vrot.lane.b32.xlu0 %v958, 96
        %v966 = vpop.permute.xlu0 %965
        %v967 = vsel %vm381, %v964, 0
        %v969 = vsel %vm381, %v966, 0
        %971 = vmatpush.msra.mxu0 0.0
        %972 = vmatpush.msra.mxu0 0.0
        %973 = vmatpush.msra.mxu0 0.0
        %974 = vmatpush.msra.mxu0 0.0
        %975 = vmatpush.msra.mxu0 0.0
        %976 = vmatpush.msra.mxu0 0.0
        %977 = vmatpush.msra.mxu0 0.0
        %978 = vmatpush.msra.mxu0 0.0
        %979 = vmatpush.msra.mxu0 0.0
        %980 = vmatpush.msra.mxu0 0.0
        %981 = vmatpush.msra.mxu0 0.0
        %982 = vmatpush.msra.mxu0 0.0
        %983 = vmatpush.msra.mxu0 %v215
        %984 = vmatpush.msra.mxu0 %v214
        %985 = vmatpush.msra.mxu0 %v213
        %986 = vmatpush.msra.mxu0 %v212
        %987 = vmatmul.f32.gmra.mxu0 %v967
        %v988 = vpop.f32.mrf.mxu0
        %v989 = vadd.f32 0.0, %v988
        %990 = vmatmul.f32.gmra.mxu0 %v969
        %v991 = vpop.f32.mrf.mxu0
        %v992 = vadd.f32 0.0, %v991
        %993 = vdwg.mxu0
        %v994 = vadd.f32 %v370, %v989
        %v995 = vadd.f32 %v373, %v992
        %v996 = vtanh.pop %v994
        %v997 = vtanh.pop %v995
        %v998 = vmul.f32 %v996, 0.5
        %v999 = vmul.f32 %v997, 0.5
        %v1000 = vadd.f32 %v998, 0.5
        %v1001 = vadd.f32 %v999, 0.5
        %1004 = vrot.lane.b32.xlu0 %v996, 32
        %v1005 = vpop.permute.xlu0 %1004
        %1006 = vrot.lane.b32.xlu0 %v997, 32
        %v1007 = vpop.permute.xlu0 %1006
        %v1010 = vmul.f32 %v1000, %v1005
        %v1011 = vmul.f32 %v1001, %v1007
        %1014 = vrot.lane.b32.xlu0 %v959, 64
        %v1015 = vpop.permute.xlu0 %1014
        %1016 = vrot.lane.b32.xlu0 %v960, 64
        %v1017 = vpop.permute.xlu0 %1016
        %v1020 = vmul.f32 %v1000, %v1015
        %v1021 = vmul.f32 %v1001, %v1017
        %1024 = vrot.lane.b32.xlu0 %v1020, 64
        %v1025 = vpop.permute.xlu0 %1024
        %1026 = vrot.lane.b32.xlu0 %v1021, 64
        %v1027 = vpop.permute.xlu0 %1026
        %v1030 = vadd.f32 %v1010, %v1025
        %v1031 = vadd.f32 %v1011, %v1027
        %v1032 = vtanh.pop %v1030
        %v1033 = vtanh.pop %v1031
        %1036 = vrot.lane.b32.xlu0 %v1032, 32
        %v1037 = vpop.permute.xlu0 %1036
        %1038 = vrot.lane.b32.xlu0 %v1033, 32
        %v1039 = vpop.permute.xlu0 %1038
        %v1042 = vmul.f32 %v1000, %v1037
        %v1043 = vmul.f32 %v1001, %v1039
        %vm1044 = vcmp.gt.s32.totalorder %v248, 6
        %vm1045 = vcmp.gt.s32.totalorder %v249, 6
        %v1046 = vsel %vm1044, 1, 0
        %v1047 = vsel %vm1045, 1, 0
        %1048 = vset.pattern.permute.xlu0 0
        %1049 = vperm.xlu0 %1048, %v1046
        %v1050 = vpop.permute.xlu0 %1049
        %1051 = vset.pattern.permute.xlu0 0
        %1052 = vperm.xlu0 %1051, %v1047
        %v1053 = vpop.permute.xlu0 %1052
        %vm1054 = vcmp.eq.s32.totalorder %v1050, 1
        %vm1055 = vcmp.eq.s32.totalorder %v1053, 1
        %v1056 = vsel %vm1054, %v1042, %v957
        %v1057 = vsel %vm1055, %v1043, %v958
        %v1058 = vsel %vm1054, %v1030, %v959
        %v1059 = vsel %vm1055, %v1031, %v960
        %1062 = vrot.lane.b32.xlu0 %v1056, 96
        %v1063 = vpop.permute.xlu0 %1062
        %1064 = vrot.lane.b32.xlu0 %v1057, 96
        %v1065 = vpop.permute.xlu0 %1064
        %v1066 = vsel %vm381, %v1063, 0
        %v1068 = vsel %vm381, %v1065, 0
        %1070 = vmatpush.msra.mxu0 0.0
        %1071 = vmatpush.msra.mxu0 0.0
        %1072 = vmatpush.msra.mxu0 0.0
        %1073 = vmatpush.msra.mxu0 0.0
        %1074 = vmatpush.msra.mxu0 0.0
        %1075 = vmatpush.msra.mxu0 0.0
        %1076 = vmatpush.msra.mxu0 0.0
        %1077 = vmatpush.msra.mxu0 0.0
        %1078 = vmatpush.msra.mxu0 0.0
        %1079 = vmatpush.msra.mxu0 0.0
        %1080 = vmatpush.msra.mxu0 0.0
        %1081 = vmatpush.msra.mxu0 0.0
        %1082 = vmatpush.msra.mxu0 %v215
        %1083 = vmatpush.msra.mxu0 %v214
        %1084 = vmatpush.msra.mxu0 %v213
        %1085 = vmatpush.msra.mxu0 %v212
        %1086 = vmatmul.f32.gmra.mxu0 %v1066
        %v1087 = vpop.f32.mrf.mxu0
        %v1088 = vadd.f32 0.0, %v1087
        %1089 = vmatmul.f32.gmra.mxu0 %v1068
        %v1090 = vpop.f32.mrf.mxu0
        %v1091 = vadd.f32 0.0, %v1090
        %1092 = vdwg.mxu0
        %v1093 = vadd.f32 %v376, %v1088
        %v1094 = vadd.f32 %v379, %v1091
        %v1095 = vtanh.pop %v1093
        %v1096 = vtanh.pop %v1094
        %v1097 = vmul.f32 %v1095, 0.5
        %v1098 = vmul.f32 %v1096, 0.5
        %v1099 = vadd.f32 %v1097, 0.5
        %v1100 = vadd.f32 %v1098, 0.5
        %1103 = vrot.lane.b32.xlu0 %v1095, 32
        %v1104 = vpop.permute.xlu0 %1103
        %1105 = vrot.lane.b32.xlu0 %v1096, 32
        %v1106 = vpop.permute.xlu0 %1105
        %v1109 = vmul.f32 %v1099, %v1104
        %v1110 = vmul.f32 %v1100, %v1106
        %1113 = vrot.lane.b32.xlu0 %v1058, 64
        %v1114 = vpop.permute.xlu0 %1113
        %1115 = vrot.lane.b32.xlu0 %v1059, 64
        %v1116 = vpop.permute.xlu0 %1115
        %v1119 = vmul.f32 %v1099, %v1114
        %v1120 = vmul.f32 %v1100, %v1116
        %1123 = vrot.lane.b32.xlu0 %v1119, 64
        %v1124 = vpop.permute.xlu0 %1123
        %1125 = vrot.lane.b32.xlu0 %v1120, 64
        %v1126 = vpop.permute.xlu0 %1125
        %v1129 = vadd.f32 %v1109, %v1124
        %v1130 = vadd.f32 %v1110, %v1126
        %v1131 = vtanh.pop %v1129
        %v1132 = vtanh.pop %v1130
        %1135 = vrot.lane.b32.xlu0 %v1131, 32
        %v1136 = vpop.permute.xlu0 %1135
        %1137 = vrot.lane.b32.xlu0 %v1132, 32
        %v1138 = vpop.permute.xlu0 %1137
        %v1141 = vmul.f32 %v1099, %v1136
        %v1142 = vmul.f32 %v1100, %v1138
        %vm1143 = vcmp.gt.s32.totalorder %v248, 7
        %vm1144 = vcmp.gt.s32.totalorder %v249, 7
        %v1145 = vsel %vm1143, 1, 0
        %v1146 = vsel %vm1144, 1, 0
        %1147 = vset.pattern.permute.xlu0 0
        %1148 = vperm.xlu0 %1147, %v1145
        %v1149 = vpop.permute.xlu0 %1148
        %1150 = vset.pattern.permute.xlu0 0
        %1151 = vperm.xlu0 %1150, %v1146
        %v1152 = vpop.permute.xlu0 %1151
        %vm1153 = vcmp.eq.s32.totalorder %v1149, 1
        %vm1154 = vcmp.eq.s32.totalorder %v1152, 1
        %v1155 = vsel %vm1153, %v1141, %v1056
        %v1156 = vsel %vm1154, %v1142, %v1057
        %v1157 = vperm.slane %v221, 0
        %1160 = vrot.lane.b32.xlu0 %v1155, 96
        %v1161 = vpop.permute.xlu0 %1160
        %1162 = vrot.lane.b32.xlu0 %v1156, 96
        %v1163 = vpop.permute.xlu0 %1162
        %v1164 = vsel %vm381, %v1161, 0
        %v1166 = vsel %vm381, %v1163, 0
        %1168 = vmatpush.msra.mxu0 0.0
        %1169 = vmatpush.msra.mxu0 0.0
        %1170 = vmatpush.msra.mxu0 0.0
        %1171 = vmatpush.msra.mxu0 0.0
        %1172 = vmatpush.msra.mxu0 0.0
        %1173 = vmatpush.msra.mxu0 0.0
        %1174 = vmatpush.msra.mxu0 0.0
        %1175 = vmatpush.msra.mxu0 0.0
        %1176 = vmatpush.msra.mxu0 0.0
        %1177 = vmatpush.msra.mxu0 0.0
        %1178 = vmatpush.msra.mxu0 0.0
        %1179 = vmatpush.msra.mxu0 0.0
        %1180 = vmatpush.msra.mxu0 %v219
        %1181 = vmatpush.msra.mxu0 %v218
        %1182 = vmatpush.msra.mxu0 %v217
        %1183 = vmatpush.msra.mxu0 %v216
        %1184 = vmatmul.f32.gmra.mxu0 %v1164
        %v1185 = vpop.f32.mrf.mxu0
        %v1186 = vadd.f32 %v1157, %v1185
        %1187 = vmatmul.f32.gmra.mxu0 %v1166
        %v1188 = vpop.f32.mrf.mxu0
        %v1189 = vadd.f32 %v1157, %v1188
        %1190 = vdwg.mxu0
        %v1191 = vtanh.pop %v1186
        %v1192 = vtanh.pop %v1189
        %v1193 = vmul.f32 %v1191, 0.5
        %v1194 = vmul.f32 %v1192, 0.5
        %v1195 = vadd.f32 %v1193, 0.5
        %v1196 = vadd.f32 %v1194, 0.5
        %1199 = vrot.lane.b32.xlu0 %v1191, 32
        %v1200 = vpop.permute.xlu0 %1199
        %1201 = vrot.lane.b32.xlu0 %v1192, 32
        %v1202 = vpop.permute.xlu0 %1201
        %v1205 = vmul.f32 %v1195, %v1200
        %v1206 = vmul.f32 %v1196, %v1202
        %v1207 = vmul.f32 %v1195, 0.0
        %v1208 = vmul.f32 %v1196, 0.0
        %1211 = vrot.lane.b32.xlu0 %v1207, 64
        %v1212 = vpop.permute.xlu0 %1211
        %1213 = vrot.lane.b32.xlu0 %v1208, 64
        %v1214 = vpop.permute.xlu0 %1213
        %v1217 = vadd.f32 %v1205, %v1212
        %v1218 = vadd.f32 %v1206, %v1214
        %v1219 = vtanh.pop %v1217
        %v1220 = vtanh.pop %v1218
        %1223 = vrot.lane.b32.xlu0 %v1219, 32
        %v1224 = vpop.permute.xlu0 %1223
        %1225 = vrot.lane.b32.xlu0 %v1220, 32
        %v1226 = vpop.permute.xlu0 %1225
        %v1229 = vmul.f32 %v1195, %v1224
        %v1230 = vmul.f32 %v1196, %v1226
        %v1231 = vmul.f32 %v1229, %v1230
        %v1232 = vsub.f32 %v1229, %v1230
        %v1233 = vand.u32 2147483647, %v1232
        %1235 = vrot.lane.b32.xlu0 %v1231, 96
        %v1236 = vpop.permute.xlu0 %1235
        %v1238 = vsel %vm381, %v1236, %v1233
        %v1239 = vperm.slane %v230, 0
        %vm1240 = vcmask 523264
        %v1242 = vsel %vm1240, %v1238, 0
        %1244 = vmatpush.msra.mxu0 0.0
        %1245 = vmatpush.msra.mxu0 0.0
        %1246 = vmatpush.msra.mxu0 0.0
        %1247 = vmatpush.msra.mxu0 0.0
        %1248 = vmatpush.msra.mxu0 0.0
        %1249 = vmatpush.msra.mxu0 0.0
        %1250 = vmatpush.msra.mxu0 0.0
        %1251 = vmatpush.msra.mxu0 0.0
        %1252 = vmatpush.msra.mxu0 %v229
        %1253 = vmatpush.msra.mxu0 %v228
        %1254 = vmatpush.msra.mxu0 %v227
        %1255 = vmatpush.msra.mxu0 %v226
        %1256 = vmatpush.msra.mxu0 %v225
        %1257 = vmatpush.msra.mxu0 %v224
        %1258 = vmatpush.msra.mxu0 %v223
        %1259 = vmatpush.msra.mxu0 %v222
        %1260 = vmatmul.f32.gmra.mxu0 %v1242
        %v1261 = vpop.f32.mrf.mxu0
        %v1262 = vadd.f32 %v1239, %v1261
        %1263 = vdwg.mxu0
        %v1264 = vtanh.pop %v1262
        %v1265 = vmul.f32 %v1264, 0.5
        %v1266 = vadd.f32 %v1265, 0.5
        %v1267 = vperm.slane %v247, 0
        %1268 = vmatpush.msra.mxu0 %v246
        %1269 = vmatpush.msra.mxu0 %v245
        %1270 = vmatpush.msra.mxu0 %v244
        %1271 = vmatpush.msra.mxu0 %v243
        %1272 = vmatpush.msra.mxu0 %v242
        %1273 = vmatpush.msra.mxu0 %v241
        %1274 = vmatpush.msra.mxu0 %v240
        %1275 = vmatpush.msra.mxu0 %v239
        %1276 = vmatpush.msra.mxu0 %v238
        %1277 = vmatpush.msra.mxu0 %v237
        %1278 = vmatpush.msra.mxu0 %v236
        %1279 = vmatpush.msra.mxu0 %v235
        %1280 = vmatpush.msra.mxu0 %v234
        %1281 = vmatpush.msra.mxu0 %v233
        %1282 = vmatpush.msra.mxu0 %v232
        %1283 = vmatpush.msra.mxu0 %v231
        %1284 = vmatmul.f32.gmra.mxu0 %v1266
        %v1285 = vpop.f32.mrf.mxu0
        %v1286 = vadd.f32 %v1267, %v1285
        %1287 = vdwg.mxu0
        %1288 = vmax.xlane.f32.xlu0 %v1286
        %v1289 = vpop.xlane.xlu0 %1288
        %v1290 = vsub.f32 %v1286, %v1289
        %v1291 = vmul.f32 %v1290, 1.442695
        %v1292 = vpow.pop %v1291
        %1293 = vadd.xlane.f32.xlu0 %v1292
        %v1294 = vpop.xlane.xlu0 %1293
        %v1295 = vlog2.pop %v1294
        %v1296 = vmul.f32 %v1295, 0.6931472
        %v1297 = vsub.f32 %v1290, %v1296
        %1298 = vst [vmem:[%s209] sm:$0xff] %v1297
        %p1299 = scmp.lt.s32.totalorder %s15, 1
        %s1300 = scalar_select %p1299, %s15, 1
        %s1301 = smul.addr %s1300, 8
        %s1302 = scalar_lea.vmem %s3, %s1301
        // Predicated region
        $region37: #{pair_cross_lstm_forward.1} parent=31 // pred_check
          %p1303 = pneg %p106
        $region38: #{pair_cross_lstm_forward.1} parent=31 // pred_check_branch
          %1305 = sbr.rel (%p1303) target = $region40
        $region39: #{pair_cross_lstm_forward.1} parent=31 // pred_region
          _
        $region40: #{pair_cross_lstm_forward.1} parent=31 // pred_fallthru
          _
      $region32: #{pair_cross_lstm_forward.1} parent=5 // pred_fallthru
        _
      %p1306 = scmp.le.s32.totalorder 2, %s10
      // Predicated region
      $region41: #{pair_cross_lstm_forward.1} parent=5 // pred_check
        %p1307 = pneg %p1306
      $region42: #{pair_cross_lstm_forward.1} parent=5 // pred_check_branch
        %1309 = sbr.rel (%p1307) target = $region44
      $region43: #{pair_cross_lstm_forward.1} parent=5 // pred_region
        %s1310 = ssub.s32 %s10, 2
        // Predicated region
        $region45: #{pair_cross_lstm_forward.1} parent=43 // pred_check
          %p1311 = pneg %p112
        $region46: #{pair_cross_lstm_forward.1} parent=43 // pred_check_branch
          %1313 = sbr.rel (%p1311) target = $region48
        $region47: #{pair_cross_lstm_forward.1} parent=43 // pred_region
          %p1314 = scmp.lt.s32.totalorder %s16, 1
          %s1315 = scalar_select %p1314, %s16, 1
          %s1316 = smul.addr %s1315, 8
          %s1317 = scalar_lea.vmem %s3, %s1316
        $region48: #{pair_cross_lstm_forward.1} parent=43 // pred_fallthru
          _
      $region44: #{pair_cross_lstm_forward.1} parent=5 // pred_fallthru
        _
    $region6: #{pair_cross_lstm_forward.1} parent=1 // loop_footer
      %s14 = sadd.s32 1, %s10
    $region7: #{pair_cross_lstm_forward.1} parent=1 // loop_footer_branch
      %9 = sbr.rel target = $region3
    $region8: #{pair_cross_lstm_forward.1} parent=1 // loop_exit
      _
    %1318 = vsyncpa [#allocation3], 1
    %s1319 = scalar_lea.sflag [#allocation3], 1
    %1320 = vsyncpa %s1319, 1

</llo_original>
